<compile_context>
chip_gen: v6e
topology: v6e:2x2x1
jax: 0.10.0
libtpu: 0.0.40
codegen_flags: <defaults>
</compile_context>

<pallas_src>
import numpy as np
import jax
import jax.numpy as jnp
from jax.experimental import pallas as pl
from jax.experimental.pallas import tpu as pltpu

_LANE = 128


def _round_up(x, m):
    return ((x + m - 1) // m) * m


def _sublane_tile(dtype):
    """Native second-minor packing: 8 rows f32, 16 bf16, 32 int8/fp8."""
    return 8 * (4 // jnp.dtype(dtype).itemsize)


def _build_gather(n, d_pad, b_pad, tb, dtype):
    """Fixed-shape pallas_call: (int32[b_pad], [n, d_pad]) -> [b_pad, d_pad].

    Per grid step t the kernel fills one (tb, d_pad) output tile by DMA-ing tb
    individual dataset rows HBM->VMEM, double-buffered across grid steps.
    """

    def kernel(idx_ref, pts_hbm, out_ref, buf, sem):
        # idx_ref : SMEM int32[b_pad]     scalar-prefetched batch indices
        # pts_hbm : HBM  [n, d_pad]       dataset points (never bulk-copied)
        # out_ref : VMEM [tb, d_pad]      output tile for this grid step
        # buf     : VMEM [2, tb, d_pad]   double-buffered row staging
        # sem     : DMA sems [2, tb]
        t = pl.program_id(0)
        nt = pl.num_programs(0)
        slot = t & 1

        def start_tile(tile, slot_):
            # tb is a small static constant -> fully unrolled; one row DMA each.
            for r in range(tb):
                src = idx_ref[tile * tb + r]
                pltpu.make_async_copy(
                    pts_hbm.at[pl.ds(src, 1), :],
                    buf.at[slot_, pl.ds(r, 1), :],
                    sem.at[slot_, r],
                ).start()

        # Prime the pipeline on the first step.
        @pl.when(t == 0)
        def _():
            start_tile(0, 0)

        # Prefetch next tile's rows into the other slot while this tile drains.
        @pl.when(t + 1 < nt)
        def _():
            start_tile(t + 1, 1 - slot)

        # Wait for this tile's rows, then one full lane-dense tile store.
        for r in range(tb):
            pltpu.make_async_copy(
                pts_hbm.at[pl.ds(0, 1), :],      # shape placeholder for wait
                buf.at[slot, pl.ds(r, 1), :],
                sem.at[slot, r],
            ).wait()
        out_ref[...] = buf[slot]

    grid_spec = pltpu.PrefetchScalarGridSpec(
        num_scalar_prefetch=1,                      # indices land in SMEM
        grid=(b_pad // tb,),
        in_specs=[pl.BlockSpec(memory_space=pl.ANY)],   # points stay in HBM
        out_specs=pl.BlockSpec((tb, d_pad), lambda t, idx: (t, 0)),
        scratch_shapes=[
            pltpu.VMEM((2, tb, d_pad), dtype),
            pltpu.SemaphoreType.DMA((2, tb)),
        ],
    )
    return pl.pallas_call(
        kernel,
        out_shape=jax.ShapeDtypeStruct((b_pad, d_pad), dtype),
        grid_spec=grid_spec,
        compiler_params=pltpu.CompilerParams(
            # Sequential steps required for the cross-step double-buffer slots.
            dimension_semantics=("arbitrary",)),
    )


class SamplerVAEPallas:
    """JAX/Pallas port of SamplerVAE.

    The dataset (PyTorch `data_loader.dataset`) is represented by two device
    arrays: points [N, high_dim] and colours [N, 3]. Epoch bookkeeping is
    host-side Python state (as in the PyTorch module); the per-batch point
    gather runs in the Pallas kernel, colours via a device-side jnp.take.
    """

    def __init__(self, points, colours, batch_size, use_random_sampler=False,
                 seed=0):
        n, d = points.shape
        self._n = int(n)
        self._d = int(d)
        self._c = int(colours.shape[1])
        self._batch_size = int(batch_size)
        self._use_random_sampler = bool(use_random_sampler)
        self._rng = np.random.default_rng(seed)

        self._tb = _sublane_tile(points.dtype)
        self._b_pad = _round_up(max(self._batch_size, 1), self._tb)
        self._d_pad = _round_up(d, _LANE)

        # One-time lane padding of the point table (no-op if d % 128 == 0) so
        # row DMAs and the output tile are lane-dense; colours keep their
        # original dtype (no downcast) and are gathered outside the kernel.
        if self._d_pad != d:
            points = jnp.pad(points, ((0, 0), (0, self._d_pad - d)))
        self._points = points
        self._colours = colours

        gather = _build_gather(self._n, self._d_pad, self._b_pad, self._tb,
                               points.dtype)
        d_static = self._d

        @jax.jit
        def device_fn(idx_padded, pts_slab, colours_arr):
            full = gather(idx_padded, pts_slab)          # [b_pad, d_pad]
            pts = full[:, :d_static]                     # fixed-shape lane slice
            cols = jnp.take(colours_arr, idx_padded, axis=0)
            return pts, cols

        self._device_fn = device_fn
        self._idx_buf = np.zeros((self._b_pad,), dtype=np.int32)

        # epoch bookkeeping (mirrors the PyTorch module)
        self._epoch_done = True
        self._current_index = 0
        self._current_x_batch = []
        self._available_indices = list(range(self._n))

    # --- epoch / index bookkeeping (host-side, as in the PyTorch module) ---

    @property
    def epoch_done(self):
        return self._epoch_done

    def reset_epoch(self):
        self._epoch_done = False
        self._current_index = 0
        self._current_x_batch = []
        self._available_indices = list(range(self._n))

    def get_batch_indices(self):
        """Sequential walk through the dataset (non-RandomSampler path)."""
        start = self._current_index
        stop = min(start + self._batch_size, self._n)
        indices = np.arange(start, stop, dtype=np.int32)
        self._current_x_batch = indices
        self._current_index += self._batch_size
        if self._current_index >= self._n:
            self._epoch_done = True
        return indices

    def get_random_batch_indices(self):
        """RandomSampler path: randperm of the remaining pool, then pop."""
        batch_size = min(self._batch_size, len(self._available_indices))
        selected = self._rng.permutation(
            len(self._available_indices))[:batch_size].tolist()
        indices = [self._available_indices[i] for i in selected]
        for idx in sorted(selected, reverse=True):
            self._available_indices.pop(idx)
        if len(self._available_indices) == 0:
            self._epoch_done = True
        indices = np.asarray(indices, dtype=np.int32)
        self._current_x_batch = indices
        return indices

    # --- forward: the Pallas row-gather ---

    def forward(self):
        if self._use_random_sampler:
            indices = self.get_random_batch_indices()
        else:
            indices = self.get_batch_indices()
        m = int(indices.shape[0])

        # Reusable fixed-shape index buffer (padded rows gather row 0 and are
        # sliced off below); fixed shapes -> one compile per sampler.
        self._idx_buf[:] = 0
        self._idx_buf[:m] = indices

        pts_full, cols_full = self._device_fn(
            jnp.asarray(self._idx_buf), self._points, self._colours)

        if m != self._b_pad:
            points, colours = pts_full[:m], cols_full[:m]
        else:
            points, colours = pts_full, cols_full
        return {"points": (points, colours), "indices": jnp.asarray(indices)}


if __name__ == "__main__":
    key = jax.random.PRNGKey(0)
    k1, k2 = jax.random.split(key)

    N = 64          # dataset size
    HIGH_DIM = 256  # point coordinate dimension
    BATCH = 8

    dataset_points = jax.random.normal(k1, (N, HIGH_DIM), dtype=jnp.float32)
    dataset_colours = jax.random.uniform(k2, (N, 3), dtype=jnp.float32)

    # --- sequential-sampler path ---
    sampler = SamplerVAEPallas(dataset_points, dataset_colours,
                               batch_size=BATCH)
    sampler.reset_epoch()
    for _ in range(2):
        out = sampler.forward()
        pts, colours = out["points"]
        idx = out["indices"]
        jax.block_until_ready(pts)
        jax.block_until_ready(colours)
        assert pts.shape == (BATCH, HIGH_DIM)
        assert colours.shape == (BATCH, 3)
        assert jnp.allclose(pts, jnp.take(dataset_points, idx, axis=0))
        assert jnp.allclose(colours, jnp.take(dataset_colours, idx, axis=0))

    # --- non-multiple-of-8 batch (exercises the fixed-shape pad/slice path) ---
    sampler_tail = SamplerVAEPallas(dataset_points, dataset_colours,
                                    batch_size=6)
    sampler_tail.reset_epoch()
    out = sampler_tail.forward()
    pts, colours = out["points"]
    idx = out["indices"]
    jax.block_until_ready(pts)
    assert pts.shape == (6, HIGH_DIM)
    assert colours.shape == (6, 3)
    assert jnp.allclose(pts, jnp.take(dataset_points, idx, axis=0))
    assert jnp.allclose(colours, jnp.take(dataset_colours, idx, axis=0))

    # --- random-sampler path (scattered indices through the same kernel) ---
    sampler_rand = SamplerVAEPallas(dataset_points, dataset_colours,
                                    batch_size=BATCH, use_random_sampler=True)
    sampler_rand.reset_epoch()
    out = sampler_rand.forward()
    pts, colours = out["points"]
    idx = out["indices"]
    jax.block_until_ready(pts)
    jax.block_until_ready(colours)
    idx_np = np.asarray(idx)
    assert pts.shape == (BATCH, HIGH_DIM)
    assert colours.shape == (BATCH, 3)
    assert len(set(idx_np.tolist())) == BATCH
    assert idx_np.min() >= 0 and idx_np.max() < N
    assert jnp.allclose(pts, jnp.take(dataset_points, idx, axis=0))
    assert jnp.allclose(colours, jnp.take(dataset_colours, idx, axis=0))

    print("KERNEL_OK")
</pallas_src>

<mosaic_0001>
module attributes {stable_mosaic.version = 11 : i64} {
  func.func @kernel(%arg0: i32, %arg1: memref<8xi32, #tpu.memory_space<smem>>, %arg2: memref<64x256xf32, #tpu.memory_space<any>>, %arg3: memref<8x256xf32, #tpu.memory_space<vmem>>, %arg4: memref<2x8x256xf32, #tpu.memory_space<vmem>>, %arg5: memref<2x8x!tpu.dma_semaphore, #tpu.memory_space<semaphore_mem>>) attributes {dimension_semantics = [#tpu.dimension_semantics<arbitrary>], iteration_bounds = array<i64: 1>, scalar_prefetch = 1 : i64, scratch_operands = 2 : i64, tpu.core_type = #tpu.core_type<tc>, window_params = [{}, {transform_indices = @transform_1, window_bounds = array<i64: 8, 256>}]} {
    %c1_i32 = arith.constant 1 : i32
    %0 = arith.andi %arg0, %c1_i32 : i32
    %c0_i32 = arith.constant 0 : i32
    %1 = arith.cmpi eq, %arg0, %c0_i32 : i32
    %2 = arith.extui %1 : i1 to i32
    %c0_i32_0 = arith.constant 0 : i32
    %3 = arith.cmpi ne, %2, %c0_i32_0 : i32
    scf.if %3 {
      %c0_41 = arith.constant 0 : index
      %52 = memref.load %arg1[%c0_41] : memref<8xi32, #tpu.memory_space<smem>>
      %c0_i32_42 = arith.constant 0 : i32
      %c0_i32_43 = arith.constant 0 : i32
      %c0_i32_44 = arith.constant 0 : i32
      %c0_i32_45 = arith.constant 0 : i32
      %53 = tpu.memref_slice %arg2[%52, %c0_i32_45] : memref<64x256xf32, #tpu.memory_space<any>> -> memref<1x256xf32, #tpu.memory_space<any>>
      %c0_i32_46 = arith.constant 0 : i32
      %c0_i32_47 = arith.constant 0 : i32
      %54 = tpu.memref_slice %arg4[%c0_i32_42, %c0_i32_46, %c0_i32_47] : memref<2x8x256xf32, #tpu.memory_space<vmem>> -> memref<1x1x256xf32, #tpu.memory_space<vmem>>
      %55 = tpu.memref_squeeze %54 : memref<1x1x256xf32, #tpu.memory_space<vmem>> -> memref<1x256xf32, #tpu.memory_space<vmem>>
      %56 = tpu.memref_slice %arg5[%c0_i32_43, %c0_i32_44] : memref<2x8x!tpu.dma_semaphore, #tpu.memory_space<semaphore_mem>> -> memref<1x1x!tpu.dma_semaphore, #tpu.memory_space<semaphore_mem>>
      %57 = tpu.memref_squeeze %56 : memref<1x1x!tpu.dma_semaphore, #tpu.memory_space<semaphore_mem>> -> memref<!tpu.dma_semaphore, #tpu.memory_space<semaphore_mem>>
      tpu.enqueue_dma source(%53 : memref<1x256xf32, #tpu.memory_space<any>>) target(%55 : memref<1x256xf32, #tpu.memory_space<vmem>>) target_semaphore(%57 : memref<!tpu.dma_semaphore, #tpu.memory_space<semaphore_mem>>)
      %c1 = arith.constant 1 : index
      %58 = memref.load %arg1[%c1] : memref<8xi32, #tpu.memory_space<smem>>
      %c0_i32_48 = arith.constant 0 : i32
      %c0_i32_49 = arith.constant 0 : i32
      %c1_i32_50 = arith.constant 1 : i32
      %c0_i32_51 = arith.constant 0 : i32
      %59 = tpu.memref_slice %arg2[%58, %c0_i32_51] : memref<64x256xf32, #tpu.memory_space<any>> -> memref<1x256xf32, #tpu.memory_space<any>>
      %c1_i32_52 = arith.constant 1 : i32
      %c0_i32_53 = arith.constant 0 : i32
      %60 = tpu.memref_slice %arg4[%c0_i32_48, %c1_i32_52, %c0_i32_53] : memref<2x8x256xf32, #tpu.memory_space<vmem>> -> memref<1x1x256xf32, #tpu.memory_space<vmem>>
      %61 = tpu.memref_squeeze %60 : memref<1x1x256xf32, #tpu.memory_space<vmem>> -> memref<1x256xf32, #tpu.memory_space<vmem>>
      %62 = tpu.memref_slice %arg5[%c0_i32_49, %c1_i32_50] : memref<2x8x!tpu.dma_semaphore, #tpu.memory_space<semaphore_mem>> -> memref<1x1x!tpu.dma_semaphore, #tpu.memory_space<semaphore_mem>>
      %63 = tpu.memref_squeeze %62 : memref<1x1x!tpu.dma_semaphore, #tpu.memory_space<semaphore_mem>> -> memref<!tpu.dma_semaphore, #tpu.memory_space<semaphore_mem>>
      tpu.enqueue_dma source(%59 : memref<1x256xf32, #tpu.memory_space<any>>) target(%61 : memref<1x256xf32, #tpu.memory_space<vmem>>) target_semaphore(%63 : memref<!tpu.dma_semaphore, #tpu.memory_space<semaphore_mem>>)
      %c2 = arith.constant 2 : index
      %64 = memref.load %arg1[%c2] : memref<8xi32, #tpu.memory_space<smem>>
      %c0_i32_54 = arith.constant 0 : i32
      %c0_i32_55 = arith.constant 0 : i32
      %c2_i32_56 = arith.constant 2 : i32
      %c0_i32_57 = arith.constant 0 : i32
      %65 = tpu.memref_slice %arg2[%64, %c0_i32_57] : memref<64x256xf32, #tpu.memory_space<any>> -> memref<1x256xf32, #tpu.memory_space<any>>
      %c2_i32_58 = arith.constant 2 : i32
      %c0_i32_59 = arith.constant 0 : i32
      %66 = tpu.memref_slice %arg4[%c0_i32_54, %c2_i32_58, %c0_i32_59] : memref<2x8x256xf32, #tpu.memory_space<vmem>> -> memref<1x1x256xf32, #tpu.memory_space<vmem>>
      %67 = tpu.memref_squeeze %66 : memref<1x1x256xf32, #tpu.memory_space<vmem>> -> memref<1x256xf32, #tpu.memory_space<vmem>>
      %68 = tpu.memref_slice %arg5[%c0_i32_55, %c2_i32_56] : memref<2x8x!tpu.dma_semaphore, #tpu.memory_space<semaphore_mem>> -> memref<1x1x!tpu.dma_semaphore, #tpu.memory_space<semaphore_mem>>
      %69 = tpu.memref_squeeze %68 : memref<1x1x!tpu.dma_semaphore, #tpu.memory_space<semaphore_mem>> -> memref<!tpu.dma_semaphore, #tpu.memory_space<semaphore_mem>>
      tpu.enqueue_dma source(%65 : memref<1x256xf32, #tpu.memory_space<any>>) target(%67 : memref<1x256xf32, #tpu.memory_space<vmem>>) target_semaphore(%69 : memref<!tpu.dma_semaphore, #tpu.memory_space<semaphore_mem>>)
      %c3 = arith.constant 3 : index
      %70 = memref.load %arg1[%c3] : memref<8xi32, #tpu.memory_space<smem>>
      %c0_i32_60 = arith.constant 0 : i32
      %c0_i32_61 = arith.constant 0 : i32
      %c3_i32_62 = arith.constant 3 : i32
      %c0_i32_63 = arith.constant 0 : i32
      %71 = tpu.memref_slice %arg2[%70, %c0_i32_63] : memref<64x256xf32, #tpu.memory_space<any>> -> memref<1x256xf32, #tpu.memory_space<any>>
      %c3_i32_64 = arith.constant 3 : i32
      %c0_i32_65 = arith.constant 0 : i32
      %72 = tpu.memref_slice %arg4[%c0_i32_60, %c3_i32_64, %c0_i32_65] : memref<2x8x256xf32, #tpu.memory_space<vmem>> -> memref<1x1x256xf32, #tpu.memory_space<vmem>>
      %73 = tpu.memref_squeeze %72 : memref<1x1x256xf32, #tpu.memory_space<vmem>> -> memref<1x256xf32, #tpu.memory_space<vmem>>
      %74 = tpu.memref_slice %arg5[%c0_i32_61, %c3_i32_62] : memref<2x8x!tpu.dma_semaphore, #tpu.memory_space<semaphore_mem>> -> memref<1x1x!tpu.dma_semaphore, #tpu.memory_space<semaphore_mem>>
      %75 = tpu.memref_squeeze %74 : memref<1x1x!tpu.dma_semaphore, #tpu.memory_space<semaphore_mem>> -> memref<!tpu.dma_semaphore, #tpu.memory_space<semaphore_mem>>
      tpu.enqueue_dma source(%71 : memref<1x256xf32, #tpu.memory_space<any>>) target(%73 : memref<1x256xf32, #tpu.memory_space<vmem>>) target_semaphore(%75 : memref<!tpu.dma_semaphore, #tpu.memory_space<semaphore_mem>>)
      %c4 = arith.constant 4 : index
      %76 = memref.load %arg1[%c4] : memref<8xi32, #tpu.memory_space<smem>>
      %c0_i32_66 = arith.constant 0 : i32
      %c0_i32_67 = arith.constant 0 : i32
      %c4_i32_68 = arith.constant 4 : i32
      %c0_i32_69 = arith.constant 0 : i32
      %77 = tpu.memref_slice %arg2[%76, %c0_i32_69] : memref<64x256xf32, #tpu.memory_space<any>> -> memref<1x256xf32, #tpu.memory_space<any>>
      %c4_i32_70 = arith.constant 4 : i32
      %c0_i32_71 = arith.constant 0 : i32
      %78 = tpu.memref_slice %arg4[%c0_i32_66, %c4_i32_70, %c0_i32_71] : memref<2x8x256xf32, #tpu.memory_space<vmem>> -> memref<1x1x256xf32, #tpu.memory_space<vmem>>
      %79 = tpu.memref_squeeze %78 : memref<1x1x256xf32, #tpu.memory_space<vmem>> -> memref<1x256xf32, #tpu.memory_space<vmem>>
      %80 = tpu.memref_slice %arg5[%c0_i32_67, %c4_i32_68] : memref<2x8x!tpu.dma_semaphore, #tpu.memory_space<semaphore_mem>> -> memref<1x1x!tpu.dma_semaphore, #tpu.memory_space<semaphore_mem>>
      %81 = tpu.memref_squeeze %80 : memref<1x1x!tpu.dma_semaphore, #tpu.memory_space<semaphore_mem>> -> memref<!tpu.dma_semaphore, #tpu.memory_space<semaphore_mem>>
      tpu.enqueue_dma source(%77 : memref<1x256xf32, #tpu.memory_space<any>>) target(%79 : memref<1x256xf32, #tpu.memory_space<vmem>>) target_semaphore(%81 : memref<!tpu.dma_semaphore, #tpu.memory_space<semaphore_mem>>)
      %c5 = arith.constant 5 : index
      %82 = memref.load %arg1[%c5] : memref<8xi32, #tpu.memory_space<smem>>
      %c0_i32_72 = arith.constant 0 : i32
      %c0_i32_73 = arith.constant 0 : i32
      %c5_i32_74 = arith.constant 5 : i32
      %c0_i32_75 = arith.constant 0 : i32
      %83 = tpu.memref_slice %arg2[%82, %c0_i32_75] : memref<64x256xf32, #tpu.memory_space<any>> -> memref<1x256xf32, #tpu.memory_space<any>>
      %c5_i32_76 = arith.constant 5 : i32
      %c0_i32_77 = arith.constant 0 : i32
      %84 = tpu.memref_slice %arg4[%c0_i32_72, %c5_i32_76, %c0_i32_77] : memref<2x8x256xf32, #tpu.memory_space<vmem>> -> memref<1x1x256xf32, #tpu.memory_space<vmem>>
      %85 = tpu.memref_squeeze %84 : memref<1x1x256xf32, #tpu.memory_space<vmem>> -> memref<1x256xf32, #tpu.memory_space<vmem>>
      %86 = tpu.memref_slice %arg5[%c0_i32_73, %c5_i32_74] : memref<2x8x!tpu.dma_semaphore, #tpu.memory_space<semaphore_mem>> -> memref<1x1x!tpu.dma_semaphore, #tpu.memory_space<semaphore_mem>>
      %87 = tpu.memref_squeeze %86 : memref<1x1x!tpu.dma_semaphore, #tpu.memory_space<semaphore_mem>> -> memref<!tpu.dma_semaphore, #tpu.memory_space<semaphore_mem>>
      tpu.enqueue_dma source(%83 : memref<1x256xf32, #tpu.memory_space<any>>) target(%85 : memref<1x256xf32, #tpu.memory_space<vmem>>) target_semaphore(%87 : memref<!tpu.dma_semaphore, #tpu.memory_space<semaphore_mem>>)
      %c6 = arith.constant 6 : index
      %88 = memref.load %arg1[%c6] : memref<8xi32, #tpu.memory_space<smem>>
      %c0_i32_78 = arith.constant 0 : i32
      %c0_i32_79 = arith.constant 0 : i32
      %c6_i32_80 = arith.constant 6 : i32
      %c0_i32_81 = arith.constant 0 : i32
      %89 = tpu.memref_slice %arg2[%88, %c0_i32_81] : memref<64x256xf32, #tpu.memory_space<any>> -> memref<1x256xf32, #tpu.memory_space<any>>
      %c6_i32_82 = arith.constant 6 : i32
      %c0_i32_83 = arith.constant 0 : i32
      %90 = tpu.memref_slice %arg4[%c0_i32_78, %c6_i32_82, %c0_i32_83] : memref<2x8x256xf32, #tpu.memory_space<vmem>> -> memref<1x1x256xf32, #tpu.memory_space<vmem>>
      %91 = tpu.memref_squeeze %90 : memref<1x1x256xf32, #tpu.memory_space<vmem>> -> memref<1x256xf32, #tpu.memory_space<vmem>>
      %92 = tpu.memref_slice %arg5[%c0_i32_79, %c6_i32_80] : memref<2x8x!tpu.dma_semaphore, #tpu.memory_space<semaphore_mem>> -> memref<1x1x!tpu.dma_semaphore, #tpu.memory_space<semaphore_mem>>
      %93 = tpu.memref_squeeze %92 : memref<1x1x!tpu.dma_semaphore, #tpu.memory_space<semaphore_mem>> -> memref<!tpu.dma_semaphore, #tpu.memory_space<semaphore_mem>>
      tpu.enqueue_dma source(%89 : memref<1x256xf32, #tpu.memory_space<any>>) target(%91 : memref<1x256xf32, #tpu.memory_space<vmem>>) target_semaphore(%93 : memref<!tpu.dma_semaphore, #tpu.memory_space<semaphore_mem>>)
      %c7 = arith.constant 7 : index
      %94 = memref.load %arg1[%c7] : memref<8xi32, #tpu.memory_space<smem>>
      %c0_i32_84 = arith.constant 0 : i32
      %c0_i32_85 = arith.constant 0 : i32
      %c7_i32_86 = arith.constant 7 : i32
      %c0_i32_87 = arith.constant 0 : i32
      %95 = tpu.memref_slice %arg2[%94, %c0_i32_87] : memref<64x256xf32, #tpu.memory_space<any>> -> memref<1x256xf32, #tpu.memory_space<any>>
      %c7_i32_88 = arith.constant 7 : i32
      %c0_i32_89 = arith.constant 0 : i32
      %96 = tpu.memref_slice %arg4[%c0_i32_84, %c7_i32_88, %c0_i32_89] : memref<2x8x256xf32, #tpu.memory_space<vmem>> -> memref<1x1x256xf32, #tpu.memory_space<vmem>>
      %97 = tpu.memref_squeeze %96 : memref<1x1x256xf32, #tpu.memory_space<vmem>> -> memref<1x256xf32, #tpu.memory_space<vmem>>
      %98 = tpu.memref_slice %arg5[%c0_i32_85, %c7_i32_86] : memref<2x8x!tpu.dma_semaphore, #tpu.memory_space<semaphore_mem>> -> memref<1x1x!tpu.dma_semaphore, #tpu.memory_space<semaphore_mem>>
      %99 = tpu.memref_squeeze %98 : memref<1x1x!tpu.dma_semaphore, #tpu.memory_space<semaphore_mem>> -> memref<!tpu.dma_semaphore, #tpu.memory_space<semaphore_mem>>
      tpu.enqueue_dma source(%95 : memref<1x256xf32, #tpu.memory_space<any>>) target(%97 : memref<1x256xf32, #tpu.memory_space<vmem>>) target_semaphore(%99 : memref<!tpu.dma_semaphore, #tpu.memory_space<semaphore_mem>>)
    } else {
    }
    %c1_i32_1 = arith.constant 1 : i32
    %4 = arith.addi %arg0, %c1_i32_1 : i32
    %c1_i32_2 = arith.constant 1 : i32
    %5 = arith.cmpi slt, %4, %c1_i32_2 : i32
    %6 = arith.extui %5 : i1 to i32
    %c0_i32_3 = arith.constant 0 : i32
    %7 = arith.cmpi ne, %6, %c0_i32_3 : i32
    scf.if %7 {
      %c1_i32_41 = arith.constant 1 : i32
      %52 = arith.addi %arg0, %c1_i32_41 : i32
      %c1_i32_42 = arith.constant 1 : i32
      %53 = arith.subi %c1_i32_42, %0 : i32
      %c8_i32 = arith.constant 8 : i32
      %54 = arith.muli %52, %c8_i32 : i32
      %c0_i32_43 = arith.constant 0 : i32
      %55 = arith.addi %54, %c0_i32_43 : i32
      %56 = arith.index_cast %55 : i32 to index
      %57 = memref.load %arg1[%56] : memref<8xi32, #tpu.memory_space<smem>>
      %c0_i32_44 = arith.constant 0 : i32
      %c0_i32_45 = arith.constant 0 : i32
      %58 = tpu.memref_slice %arg2[%57, %c0_i32_45] : memref<64x256xf32, #tpu.memory_space<any>> -> memref<1x256xf32, #tpu.memory_space<any>>
      %c0_i32_46 = arith.constant 0 : i32
      %c0_i32_47 = arith.constant 0 : i32
      %59 = tpu.memref_slice %arg4[%53, %c0_i32_46, %c0_i32_47] : memref<2x8x256xf32, #tpu.memory_space<vmem>> -> memref<1x1x256xf32, #tpu.memory_space<vmem>>
      %60 = tpu.memref_squeeze %59 : memref<1x1x256xf32, #tpu.memory_space<vmem>> -> memref<1x256xf32, #tpu.memory_space<vmem>>
      %61 = tpu.memref_slice %arg5[%53, %c0_i32_44] : memref<2x8x!tpu.dma_semaphore, #tpu.memory_space<semaphore_mem>> -> memref<1x1x!tpu.dma_semaphore, #tpu.memory_space<semaphore_mem>>
      %62 = tpu.memref_squeeze %61 : memref<1x1x!tpu.dma_semaphore, #tpu.memory_space<semaphore_mem>> -> memref<!tpu.dma_semaphore, #tpu.memory_space<semaphore_mem>>
      tpu.enqueue_dma source(%58 : memref<1x256xf32, #tpu.memory_space<any>>) target(%60 : memref<1x256xf32, #tpu.memory_space<vmem>>) target_semaphore(%62 : memref<!tpu.dma_semaphore, #tpu.memory_space<semaphore_mem>>)
      %c8_i32_48 = arith.constant 8 : i32
      %63 = arith.muli %52, %c8_i32_48 : i32
      %c1_i32_49 = arith.constant 1 : i32
      %64 = arith.addi %63, %c1_i32_49 : i32
      %65 = arith.index_cast %64 : i32 to index
      %66 = memref.load %arg1[%65] : memref<8xi32, #tpu.memory_space<smem>>
      %c1_i32_50 = arith.constant 1 : i32
      %c0_i32_51 = arith.constant 0 : i32
      %67 = tpu.memref_slice %arg2[%66, %c0_i32_51] : memref<64x256xf32, #tpu.memory_space<any>> -> memref<1x256xf32, #tpu.memory_space<any>>
      %c1_i32_52 = arith.constant 1 : i32
      %c0_i32_53 = arith.constant 0 : i32
      %68 = tpu.memref_slice %arg4[%53, %c1_i32_52, %c0_i32_53] : memref<2x8x256xf32, #tpu.memory_space<vmem>> -> memref<1x1x256xf32, #tpu.memory_space<vmem>>
      %69 = tpu.memref_squeeze %68 : memref<1x1x256xf32, #tpu.memory_space<vmem>> -> memref<1x256xf32, #tpu.memory_space<vmem>>
      %70 = tpu.memref_slice %arg5[%53, %c1_i32_50] : memref<2x8x!tpu.dma_semaphore, #tpu.memory_space<semaphore_mem>> -> memref<1x1x!tpu.dma_semaphore, #tpu.memory_space<semaphore_mem>>
      %71 = tpu.memref_squeeze %70 : memref<1x1x!tpu.dma_semaphore, #tpu.memory_space<semaphore_mem>> -> memref<!tpu.dma_semaphore, #tpu.memory_space<semaphore_mem>>
      tpu.enqueue_dma source(%67 : memref<1x256xf32, #tpu.memory_space<any>>) target(%69 : memref<1x256xf32, #tpu.memory_space<vmem>>) target_semaphore(%71 : memref<!tpu.dma_semaphore, #tpu.memory_space<semaphore_mem>>)
      %c8_i32_54 = arith.constant 8 : i32
      %72 = arith.muli %52, %c8_i32_54 : i32
      %c2_i32_55 = arith.constant 2 : i32
      %73 = arith.addi %72, %c2_i32_55 : i32
      %74 = arith.index_cast %73 : i32 to index
      %75 = memref.load %arg1[%74] : memref<8xi32, #tpu.memory_space<smem>>
      %c2_i32_56 = arith.constant 2 : i32
      %c0_i32_57 = arith.constant 0 : i32
      %76 = tpu.memref_slice %arg2[%75, %c0_i32_57] : memref<64x256xf32, #tpu.memory_space<any>> -> memref<1x256xf32, #tpu.memory_space<any>>
      %c2_i32_58 = arith.constant 2 : i32
      %c0_i32_59 = arith.constant 0 : i32
      %77 = tpu.memref_slice %arg4[%53, %c2_i32_58, %c0_i32_59] : memref<2x8x256xf32, #tpu.memory_space<vmem>> -> memref<1x1x256xf32, #tpu.memory_space<vmem>>
      %78 = tpu.memref_squeeze %77 : memref<1x1x256xf32, #tpu.memory_space<vmem>> -> memref<1x256xf32, #tpu.memory_space<vmem>>
      %79 = tpu.memref_slice %arg5[%53, %c2_i32_56] : memref<2x8x!tpu.dma_semaphore, #tpu.memory_space<semaphore_mem>> -> memref<1x1x!tpu.dma_semaphore, #tpu.memory_space<semaphore_mem>>
      %80 = tpu.memref_squeeze %79 : memref<1x1x!tpu.dma_semaphore, #tpu.memory_space<semaphore_mem>> -> memref<!tpu.dma_semaphore, #tpu.memory_space<semaphore_mem>>
      tpu.enqueue_dma source(%76 : memref<1x256xf32, #tpu.memory_space<any>>) target(%78 : memref<1x256xf32, #tpu.memory_space<vmem>>) target_semaphore(%80 : memref<!tpu.dma_semaphore, #tpu.memory_space<semaphore_mem>>)
      %c8_i32_60 = arith.constant 8 : i32
      %81 = arith.muli %52, %c8_i32_60 : i32
      %c3_i32_61 = arith.constant 3 : i32
      %82 = arith.addi %81, %c3_i32_61 : i32
      %83 = arith.index_cast %82 : i32 to index
      %84 = memref.load %arg1[%83] : memref<8xi32, #tpu.memory_space<smem>>
      %c3_i32_62 = arith.constant 3 : i32
      %c0_i32_63 = arith.constant 0 : i32
      %85 = tpu.memref_slice %arg2[%84, %c0_i32_63] : memref<64x256xf32, #tpu.memory_space<any>> -> memref<1x256xf32, #tpu.memory_space<any>>
      %c3_i32_64 = arith.constant 3 : i32
      %c0_i32_65 = arith.constant 0 : i32
      %86 = tpu.memref_slice %arg4[%53, %c3_i32_64, %c0_i32_65] : memref<2x8x256xf32, #tpu.memory_space<vmem>> -> memref<1x1x256xf32, #tpu.memory_space<vmem>>
      %87 = tpu.memref_squeeze %86 : memref<1x1x256xf32, #tpu.memory_space<vmem>> -> memref<1x256xf32, #tpu.memory_space<vmem>>
      %88 = tpu.memref_slice %arg5[%53, %c3_i32_62] : memref<2x8x!tpu.dma_semaphore, #tpu.memory_space<semaphore_mem>> -> memref<1x1x!tpu.dma_semaphore, #tpu.memory_space<semaphore_mem>>
      %89 = tpu.memref_squeeze %88 : memref<1x1x!tpu.dma_semaphore, #tpu.memory_space<semaphore_mem>> -> memref<!tpu.dma_semaphore, #tpu.memory_space<semaphore_mem>>
      tpu.enqueue_dma source(%85 : memref<1x256xf32, #tpu.memory_space<any>>) target(%87 : memref<1x256xf32, #tpu.memory_space<vmem>>) target_semaphore(%89 : memref<!tpu.dma_semaphore, #tpu.memory_space<semaphore_mem>>)
      %c8_i32_66 = arith.constant 8 : i32
      %90 = arith.muli %52, %c8_i32_66 : i32
      %c4_i32_67 = arith.constant 4 : i32
      %91 = arith.addi %90, %c4_i32_67 : i32
      %92 = arith.index_cast %91 : i32 to index
      %93 = memref.load %arg1[%92] : memref<8xi32, #tpu.memory_space<smem>>
      %c4_i32_68 = arith.constant 4 : i32
      %c0_i32_69 = arith.constant 0 : i32
      %94 = tpu.memref_slice %arg2[%93, %c0_i32_69] : memref<64x256xf32, #tpu.memory_space<any>> -> memref<1x256xf32, #tpu.memory_space<any>>
      %c4_i32_70 = arith.constant 4 : i32
      %c0_i32_71 = arith.constant 0 : i32
      %95 = tpu.memref_slice %arg4[%53, %c4_i32_70, %c0_i32_71] : memref<2x8x256xf32, #tpu.memory_space<vmem>> -> memref<1x1x256xf32, #tpu.memory_space<vmem>>
      %96 = tpu.memref_squeeze %95 : memref<1x1x256xf32, #tpu.memory_space<vmem>> -> memref<1x256xf32, #tpu.memory_space<vmem>>
      %97 = tpu.memref_slice %arg5[%53, %c4_i32_68] : memref<2x8x!tpu.dma_semaphore, #tpu.memory_space<semaphore_mem>> -> memref<1x1x!tpu.dma_semaphore, #tpu.memory_space<semaphore_mem>>
      %98 = tpu.memref_squeeze %97 : memref<1x1x!tpu.dma_semaphore, #tpu.memory_space<semaphore_mem>> -> memref<!tpu.dma_semaphore, #tpu.memory_space<semaphore_mem>>
      tpu.enqueue_dma source(%94 : memref<1x256xf32, #tpu.memory_space<any>>) target(%96 : memref<1x256xf32, #tpu.memory_space<vmem>>) target_semaphore(%98 : memref<!tpu.dma_semaphore, #tpu.memory_space<semaphore_mem>>)
      %c8_i32_72 = arith.constant 8 : i32
      %99 = arith.muli %52, %c8_i32_72 : i32
      %c5_i32_73 = arith.constant 5 : i32
      %100 = arith.addi %99, %c5_i32_73 : i32
      %101 = arith.index_cast %100 : i32 to index
      %102 = memref.load %arg1[%101] : memref<8xi32, #tpu.memory_space<smem>>
      %c5_i32_74 = arith.constant 5 : i32
      %c0_i32_75 = arith.constant 0 : i32
      %103 = tpu.memref_slice %arg2[%102, %c0_i32_75] : memref<64x256xf32, #tpu.memory_space<any>> -> memref<1x256xf32, #tpu.memory_space<any>>
      %c5_i32_76 = arith.constant 5 : i32
      %c0_i32_77 = arith.constant 0 : i32
      %104 = tpu.memref_slice %arg4[%53, %c5_i32_76, %c0_i32_77] : memref<2x8x256xf32, #tpu.memory_space<vmem>> -> memref<1x1x256xf32, #tpu.memory_space<vmem>>
      %105 = tpu.memref_squeeze %104 : memref<1x1x256xf32, #tpu.memory_space<vmem>> -> memref<1x256xf32, #tpu.memory_space<vmem>>
      %106 = tpu.memref_slice %arg5[%53, %c5_i32_74] : memref<2x8x!tpu.dma_semaphore, #tpu.memory_space<semaphore_mem>> -> memref<1x1x!tpu.dma_semaphore, #tpu.memory_space<semaphore_mem>>
      %107 = tpu.memref_squeeze %106 : memref<1x1x!tpu.dma_semaphore, #tpu.memory_space<semaphore_mem>> -> memref<!tpu.dma_semaphore, #tpu.memory_space<semaphore_mem>>
      tpu.enqueue_dma source(%103 : memref<1x256xf32, #tpu.memory_space<any>>) target(%105 : memref<1x256xf32, #tpu.memory_space<vmem>>) target_semaphore(%107 : memref<!tpu.dma_semaphore, #tpu.memory_space<semaphore_mem>>)
      %c8_i32_78 = arith.constant 8 : i32
      %108 = arith.muli %52, %c8_i32_78 : i32
      %c6_i32_79 = arith.constant 6 : i32
      %109 = arith.addi %108, %c6_i32_79 : i32
      %110 = arith.index_cast %109 : i32 to index
      %111 = memref.load %arg1[%110] : memref<8xi32, #tpu.memory_space<smem>>
      %c6_i32_80 = arith.constant 6 : i32
      %c0_i32_81 = arith.constant 0 : i32
      %112 = tpu.memref_slice %arg2[%111, %c0_i32_81] : memref<64x256xf32, #tpu.memory_space<any>> -> memref<1x256xf32, #tpu.memory_space<any>>
      %c6_i32_82 = arith.constant 6 : i32
      %c0_i32_83 = arith.constant 0 : i32
      %113 = tpu.memref_slice %arg4[%53, %c6_i32_82, %c0_i32_83] : memref<2x8x256xf32, #tpu.memory_space<vmem>> -> memref<1x1x256xf32, #tpu.memory_space<vmem>>
      %114 = tpu.memref_squeeze %113 : memref<1x1x256xf32, #tpu.memory_space<vmem>> -> memref<1x256xf32, #tpu.memory_space<vmem>>
      %115 = tpu.memref_slice %arg5[%53, %c6_i32_80] : memref<2x8x!tpu.dma_semaphore, #tpu.memory_space<semaphore_mem>> -> memref<1x1x!tpu.dma_semaphore, #tpu.memory_space<semaphore_mem>>
      %116 = tpu.memref_squeeze %115 : memref<1x1x!tpu.dma_semaphore, #tpu.memory_space<semaphore_mem>> -> memref<!tpu.dma_semaphore, #tpu.memory_space<semaphore_mem>>
      tpu.enqueue_dma source(%112 : memref<1x256xf32, #tpu.memory_space<any>>) target(%114 : memref<1x256xf32, #tpu.memory_space<vmem>>) target_semaphore(%116 : memref<!tpu.dma_semaphore, #tpu.memory_space<semaphore_mem>>)
      %c8_i32_84 = arith.constant 8 : i32
      %117 = arith.muli %52, %c8_i32_84 : i32
      %c7_i32_85 = arith.constant 7 : i32
      %118 = arith.addi %117, %c7_i32_85 : i32
      %119 = arith.index_cast %118 : i32 to index
      %120 = memref.load %arg1[%119] : memref<8xi32, #tpu.memory_space<smem>>
      %c7_i32_86 = arith.constant 7 : i32
      %c0_i32_87 = arith.constant 0 : i32
      %121 = tpu.memref_slice %arg2[%120, %c0_i32_87] : memref<64x256xf32, #tpu.memory_space<any>> -> memref<1x256xf32, #tpu.memory_space<any>>
      %c7_i32_88 = arith.constant 7 : i32
      %c0_i32_89 = arith.constant 0 : i32
      %122 = tpu.memref_slice %arg4[%53, %c7_i32_88, %c0_i32_89] : memref<2x8x256xf32, #tpu.memory_space<vmem>> -> memref<1x1x256xf32, #tpu.memory_space<vmem>>
      %123 = tpu.memref_squeeze %122 : memref<1x1x256xf32, #tpu.memory_space<vmem>> -> memref<1x256xf32, #tpu.memory_space<vmem>>
      %124 = tpu.memref_slice %arg5[%53, %c7_i32_86] : memref<2x8x!tpu.dma_semaphore, #tpu.memory_space<semaphore_mem>> -> memref<1x1x!tpu.dma_semaphore, #tpu.memory_space<semaphore_mem>>
      %125 = tpu.memref_squeeze %124 : memref<1x1x!tpu.dma_semaphore, #tpu.memory_space<semaphore_mem>> -> memref<!tpu.dma_semaphore, #tpu.memory_space<semaphore_mem>>
      tpu.enqueue_dma source(%121 : memref<1x256xf32, #tpu.memory_space<any>>) target(%123 : memref<1x256xf32, #tpu.memory_space<vmem>>) target_semaphore(%125 : memref<!tpu.dma_semaphore, #tpu.memory_space<semaphore_mem>>)
    } else {
    }
    %c0_i32_4 = arith.constant 0 : i32
    %c0_i32_5 = arith.constant 0 : i32
    %c0_i32_6 = arith.constant 0 : i32
    %8 = tpu.memref_slice %arg2[%c0_i32_5, %c0_i32_6] : memref<64x256xf32, #tpu.memory_space<any>> -> memref<1x256xf32, #tpu.memory_space<any>>
    %c0_i32_7 = arith.constant 0 : i32
    %c0_i32_8 = arith.constant 0 : i32
    %9 = tpu.memref_slice %arg4[%0, %c0_i32_7, %c0_i32_8] : memref<2x8x256xf32, #tpu.memory_space<vmem>> -> memref<1x1x256xf32, #tpu.memory_space<vmem>>
    %10 = tpu.memref_squeeze %9 : memref<1x1x256xf32, #tpu.memory_space<vmem>> -> memref<1x256xf32, #tpu.memory_space<vmem>>
    %11 = tpu.memref_slice %arg5[%0, %c0_i32_4] : memref<2x8x!tpu.dma_semaphore, #tpu.memory_space<semaphore_mem>> -> memref<1x1x!tpu.dma_semaphore, #tpu.memory_space<semaphore_mem>>
    %12 = tpu.memref_squeeze %11 : memref<1x1x!tpu.dma_semaphore, #tpu.memory_space<semaphore_mem>> -> memref<!tpu.dma_semaphore, #tpu.memory_space<semaphore_mem>>
    tpu.wait_dma2 semaphore(%12 : memref<!tpu.dma_semaphore, #tpu.memory_space<semaphore_mem>>) src(%8 : memref<1x256xf32, #tpu.memory_space<any>>) dst(%10 : memref<1x256xf32, #tpu.memory_space<vmem>>)
    %c1_i32_9 = arith.constant 1 : i32
    %c0_i32_10 = arith.constant 0 : i32
    %c0_i32_11 = arith.constant 0 : i32
    %13 = tpu.memref_slice %arg2[%c0_i32_10, %c0_i32_11] : memref<64x256xf32, #tpu.memory_space<any>> -> memref<1x256xf32, #tpu.memory_space<any>>
    %c1_i32_12 = arith.constant 1 : i32
    %c0_i32_13 = arith.constant 0 : i32
    %14 = tpu.memref_slice %arg4[%0, %c1_i32_12, %c0_i32_13] : memref<2x8x256xf32, #tpu.memory_space<vmem>> -> memref<1x1x256xf32, #tpu.memory_space<vmem>>
    %15 = tpu.memref_squeeze %14 : memref<1x1x256xf32, #tpu.memory_space<vmem>> -> memref<1x256xf32, #tpu.memory_space<vmem>>
    %16 = tpu.memref_slice %arg5[%0, %c1_i32_9] : memref<2x8x!tpu.dma_semaphore, #tpu.memory_space<semaphore_mem>> -> memref<1x1x!tpu.dma_semaphore, #tpu.memory_space<semaphore_mem>>
    %17 = tpu.memref_squeeze %16 : memref<1x1x!tpu.dma_semaphore, #tpu.memory_space<semaphore_mem>> -> memref<!tpu.dma_semaphore, #tpu.memory_space<semaphore_mem>>
    tpu.wait_dma2 semaphore(%17 : memref<!tpu.dma_semaphore, #tpu.memory_space<semaphore_mem>>) src(%13 : memref<1x256xf32, #tpu.memory_space<any>>) dst(%15 : memref<1x256xf32, #tpu.memory_space<vmem>>)
    %c2_i32 = arith.constant 2 : i32
    %c0_i32_14 = arith.constant 0 : i32
    %c0_i32_15 = arith.constant 0 : i32
    %18 = tpu.memref_slice %arg2[%c0_i32_14, %c0_i32_15] : memref<64x256xf32, #tpu.memory_space<any>> -> memref<1x256xf32, #tpu.memory_space<any>>
    %c2_i32_16 = arith.constant 2 : i32
    %c0_i32_17 = arith.constant 0 : i32
    %19 = tpu.memref_slice %arg4[%0, %c2_i32_16, %c0_i32_17] : memref<2x8x256xf32, #tpu.memory_space<vmem>> -> memref<1x1x256xf32, #tpu.memory_space<vmem>>
    %20 = tpu.memref_squeeze %19 : memref<1x1x256xf32, #tpu.memory_space<vmem>> -> memref<1x256xf32, #tpu.memory_space<vmem>>
    %21 = tpu.memref_slice %arg5[%0, %c2_i32] : memref<2x8x!tpu.dma_semaphore, #tpu.memory_space<semaphore_mem>> -> memref<1x1x!tpu.dma_semaphore, #tpu.memory_space<semaphore_mem>>
    %22 = tpu.memref_squeeze %21 : memref<1x1x!tpu.dma_semaphore, #tpu.memory_space<semaphore_mem>> -> memref<!tpu.dma_semaphore, #tpu.memory_space<semaphore_mem>>
    tpu.wait_dma2 semaphore(%22 : memref<!tpu.dma_semaphore, #tpu.memory_space<semaphore_mem>>) src(%18 : memref<1x256xf32, #tpu.memory_space<any>>) dst(%20 : memref<1x256xf32, #tpu.memory_space<vmem>>)
    %c3_i32 = arith.constant 3 : i32
    %c0_i32_18 = arith.constant 0 : i32
    %c0_i32_19 = arith.constant 0 : i32
    %23 = tpu.memref_slice %arg2[%c0_i32_18, %c0_i32_19] : memref<64x256xf32, #tpu.memory_space<any>> -> memref<1x256xf32, #tpu.memory_space<any>>
    %c3_i32_20 = arith.constant 3 : i32
    %c0_i32_21 = arith.constant 0 : i32
    %24 = tpu.memref_slice %arg4[%0, %c3_i32_20, %c0_i32_21] : memref<2x8x256xf32, #tpu.memory_space<vmem>> -> memref<1x1x256xf32, #tpu.memory_space<vmem>>
    %25 = tpu.memref_squeeze %24 : memref<1x1x256xf32, #tpu.memory_space<vmem>> -> memref<1x256xf32, #tpu.memory_space<vmem>>
    %26 = tpu.memref_slice %arg5[%0, %c3_i32] : memref<2x8x!tpu.dma_semaphore, #tpu.memory_space<semaphore_mem>> -> memref<1x1x!tpu.dma_semaphore, #tpu.memory_space<semaphore_mem>>
    %27 = tpu.memref_squeeze %26 : memref<1x1x!tpu.dma_semaphore, #tpu.memory_space<semaphore_mem>> -> memref<!tpu.dma_semaphore, #tpu.memory_space<semaphore_mem>>
    tpu.wait_dma2 semaphore(%27 : memref<!tpu.dma_semaphore, #tpu.memory_space<semaphore_mem>>) src(%23 : memref<1x256xf32, #tpu.memory_space<any>>) dst(%25 : memref<1x256xf32, #tpu.memory_space<vmem>>)
    %c4_i32 = arith.constant 4 : i32
    %c0_i32_22 = arith.constant 0 : i32
    %c0_i32_23 = arith.constant 0 : i32
    %28 = tpu.memref_slice %arg2[%c0_i32_22, %c0_i32_23] : memref<64x256xf32, #tpu.memory_space<any>> -> memref<1x256xf32, #tpu.memory_space<any>>
    %c4_i32_24 = arith.constant 4 : i32
    %c0_i32_25 = arith.constant 0 : i32
    %29 = tpu.memref_slice %arg4[%0, %c4_i32_24, %c0_i32_25] : memref<2x8x256xf32, #tpu.memory_space<vmem>> -> memref<1x1x256xf32, #tpu.memory_space<vmem>>
    %30 = tpu.memref_squeeze %29 : memref<1x1x256xf32, #tpu.memory_space<vmem>> -> memref<1x256xf32, #tpu.memory_space<vmem>>
    %31 = tpu.memref_slice %arg5[%0, %c4_i32] : memref<2x8x!tpu.dma_semaphore, #tpu.memory_space<semaphore_mem>> -> memref<1x1x!tpu.dma_semaphore, #tpu.memory_space<semaphore_mem>>
    %32 = tpu.memref_squeeze %31 : memref<1x1x!tpu.dma_semaphore, #tpu.memory_space<semaphore_mem>> -> memref<!tpu.dma_semaphore, #tpu.memory_space<semaphore_mem>>
    tpu.wait_dma2 semaphore(%32 : memref<!tpu.dma_semaphore, #tpu.memory_space<semaphore_mem>>) src(%28 : memref<1x256xf32, #tpu.memory_space<any>>) dst(%30 : memref<1x256xf32, #tpu.memory_space<vmem>>)
    %c5_i32 = arith.constant 5 : i32
    %c0_i32_26 = arith.constant 0 : i32
    %c0_i32_27 = arith.constant 0 : i32
    %33 = tpu.memref_slice %arg2[%c0_i32_26, %c0_i32_27] : memref<64x256xf32, #tpu.memory_space<any>> -> memref<1x256xf32, #tpu.memory_space<any>>
    %c5_i32_28 = arith.constant 5 : i32
    %c0_i32_29 = arith.constant 0 : i32
    %34 = tpu.memref_slice %arg4[%0, %c5_i32_28, %c0_i32_29] : memref<2x8x256xf32, #tpu.memory_space<vmem>> -> memref<1x1x256xf32, #tpu.memory_space<vmem>>
    %35 = tpu.memref_squeeze %34 : memref<1x1x256xf32, #tpu.memory_space<vmem>> -> memref<1x256xf32, #tpu.memory_space<vmem>>
    %36 = tpu.memref_slice %arg5[%0, %c5_i32] : memref<2x8x!tpu.dma_semaphore, #tpu.memory_space<semaphore_mem>> -> memref<1x1x!tpu.dma_semaphore, #tpu.memory_space<semaphore_mem>>
    %37 = tpu.memref_squeeze %36 : memref<1x1x!tpu.dma_semaphore, #tpu.memory_space<semaphore_mem>> -> memref<!tpu.dma_semaphore, #tpu.memory_space<semaphore_mem>>
    tpu.wait_dma2 semaphore(%37 : memref<!tpu.dma_semaphore, #tpu.memory_space<semaphore_mem>>) src(%33 : memref<1x256xf32, #tpu.memory_space<any>>) dst(%35 : memref<1x256xf32, #tpu.memory_space<vmem>>)
    %c6_i32 = arith.constant 6 : i32
    %c0_i32_30 = arith.constant 0 : i32
    %c0_i32_31 = arith.constant 0 : i32
    %38 = tpu.memref_slice %arg2[%c0_i32_30, %c0_i32_31] : memref<64x256xf32, #tpu.memory_space<any>> -> memref<1x256xf32, #tpu.memory_space<any>>
    %c6_i32_32 = arith.constant 6 : i32
    %c0_i32_33 = arith.constant 0 : i32
    %39 = tpu.memref_slice %arg4[%0, %c6_i32_32, %c0_i32_33] : memref<2x8x256xf32, #tpu.memory_space<vmem>> -> memref<1x1x256xf32, #tpu.memory_space<vmem>>
    %40 = tpu.memref_squeeze %39 : memref<1x1x256xf32, #tpu.memory_space<vmem>> -> memref<1x256xf32, #tpu.memory_space<vmem>>
    %41 = tpu.memref_slice %arg5[%0, %c6_i32] : memref<2x8x!tpu.dma_semaphore, #tpu.memory_space<semaphore_mem>> -> memref<1x1x!tpu.dma_semaphore, #tpu.memory_space<semaphore_mem>>
    %42 = tpu.memref_squeeze %41 : memref<1x1x!tpu.dma_semaphore, #tpu.memory_space<semaphore_mem>> -> memref<!tpu.dma_semaphore, #tpu.memory_space<semaphore_mem>>
    tpu.wait_dma2 semaphore(%42 : memref<!tpu.dma_semaphore, #tpu.memory_space<semaphore_mem>>) src(%38 : memref<1x256xf32, #tpu.memory_space<any>>) dst(%40 : memref<1x256xf32, #tpu.memory_space<vmem>>)
    %c7_i32 = arith.constant 7 : i32
    %c0_i32_34 = arith.constant 0 : i32
    %c0_i32_35 = arith.constant 0 : i32
    %43 = tpu.memref_slice %arg2[%c0_i32_34, %c0_i32_35] : memref<64x256xf32, #tpu.memory_space<any>> -> memref<1x256xf32, #tpu.memory_space<any>>
    %c7_i32_36 = arith.constant 7 : i32
    %c0_i32_37 = arith.constant 0 : i32
    %44 = tpu.memref_slice %arg4[%0, %c7_i32_36, %c0_i32_37] : memref<2x8x256xf32, #tpu.memory_space<vmem>> -> memref<1x1x256xf32, #tpu.memory_space<vmem>>
    %45 = tpu.memref_squeeze %44 : memref<1x1x256xf32, #tpu.memory_space<vmem>> -> memref<1x256xf32, #tpu.memory_space<vmem>>
    %46 = tpu.memref_slice %arg5[%0, %c7_i32] : memref<2x8x!tpu.dma_semaphore, #tpu.memory_space<semaphore_mem>> -> memref<1x1x!tpu.dma_semaphore, #tpu.memory_space<semaphore_mem>>
    %47 = tpu.memref_squeeze %46 : memref<1x1x!tpu.dma_semaphore, #tpu.memory_space<semaphore_mem>> -> memref<!tpu.dma_semaphore, #tpu.memory_space<semaphore_mem>>
    tpu.wait_dma2 semaphore(%47 : memref<!tpu.dma_semaphore, #tpu.memory_space<semaphore_mem>>) src(%43 : memref<1x256xf32, #tpu.memory_space<any>>) dst(%45 : memref<1x256xf32, #tpu.memory_space<vmem>>)
    %48 = arith.index_cast %0 : i32 to index
    %c0 = arith.constant 0 : index
    %c0_38 = arith.constant 0 : index
    %49 = vector.load %arg4[%48, %c0, %c0_38] : memref<2x8x256xf32, #tpu.memory_space<vmem>>, vector<1x8x256xf32>
    %50 = vector.shape_cast %49 : vector<1x8x256xf32> to vector<8x256xf32>
    %c0_39 = arith.constant 0 : index
    %c0_40 = arith.constant 0 : index
    %51 = vector.load %arg3[%c0_39, %c0_40] : memref<8x256xf32, #tpu.memory_space<vmem>>, vector<8x256xf32>
    tpu.vector_store %arg3[%c0_39, %c0_40], %50 {strides = array<i32>} : memref<8x256xf32, #tpu.memory_space<vmem>>, vector<8x256xf32>,
    return
  }
  func.func @transform_1(%arg0: i32, %arg1: memref<8xi32, #tpu.memory_space<smem>>) -> (i32, i32) {
    %c0_i32 = arith.constant 0 : i32
    %c0_i32_0 = arith.constant 0 : i32
    return %arg0, %c0_i32 : i32, i32
  }
}

</mosaic_0001>

<llo_original>
// kernel: device_fn.1
$region0: #{device_fn.1}
  #allocation0 [shape = 'u32[]', space=smem, size = 0x4, offset = 0x4, fixed_abs, tag = 'smem constant byte address 0x4 - core index']
  #allocation1 [shape = 'u32[144,128]{1,0:T(1,128)}', space=vmem, size = 0x12000, scoped, tag = 'internal scratch']
  #allocation2 [shape = 'f32[2,8,256]{2,1,0:T(8,128)}', space=vmem, size = 0x4000, scoped, tag = 'scratch operand']
  #allocation3 [shape = 's32[16]{0}', space=sflag, size = 0x40, scoped, tag = 'scratch operand']
  #allocation4 [shape = 's32[1]{0}', space=sflag, size = 0x4, scoped, tag = 'scoped memory for device_fn.1']
  #allocation5 [shape = 'u8[512]{0}', space=smem, size = 0x200, scoped, tag = 'prefetched SMEM operand 0']
  #allocation8 [shape = 's32[]', space=sflag, size = 0x4, offset = 0, fixed_abs, tag = 'sflag constant byte address 0x0 - dummy sync flag']
  #allocation9 [shape = 's32[]', space=sflag, size = 0x4, offset = 0, fixed_abs, tag = 'sflag constant byte address 0x0 - dummy sync flag']
  #allocation10 [shape = 's32[]', space=sflag, size = 0x4, offset = 0, fixed_abs, tag = 'sflag constant byte address 0x0 - dummy sync flag']
  #allocation11 [shape = 's32[]', space=sflag, size = 0x4, offset = 0, fixed_abs, tag = 'sflag constant byte address 0x0 - dummy sync flag']
  #allocation12 [shape = 's32[]', space=sflag, size = 0x4, offset = 0, fixed_abs, tag = 'sflag constant byte address 0x0 - dummy sync flag']
  #allocation13 [shape = 's32[]', space=sflag, size = 0x4, offset = 0, fixed_abs, tag = 'sflag constant byte address 0x0 - dummy sync flag']
  #allocation14 [shape = 's32[]', space=sflag, size = 0x4, offset = 0, fixed_abs, tag = 'sflag constant byte address 0x0 - dummy sync flag']
  #allocation15 [shape = 's32[]', space=sflag, size = 0x4, offset = 0, fixed_abs, tag = 'sflag constant byte address 0x0 - dummy sync flag']
  #allocation16 [shape = 's32[]', space=sflag, size = 0x4, offset = 0, fixed_abs, tag = 'sflag constant byte address 0x0 - dummy sync flag']
  #allocation17 [shape = 's32[]', space=sflag, size = 0x4, offset = 0, fixed_abs, tag = 'sflag constant byte address 0x0 - dummy sync flag']
  #allocation18 [shape = 's32[]', space=sflag, size = 0x4, offset = 0, fixed_abs, tag = 'sflag constant byte address 0x0 - dummy sync flag']
  #allocation19 [shape = 's32[]', space=sflag, size = 0x4, offset = 0, fixed_abs, tag = 'sflag constant byte address 0x0 - dummy sync flag']
  #allocation20 [shape = 's32[]', space=sflag, size = 0x4, offset = 0, fixed_abs, tag = 'sflag constant byte address 0x0 - dummy sync flag']
  #allocation21 [shape = 's32[]', space=sflag, size = 0x4, offset = 0, fixed_abs, tag = 'sflag constant byte address 0x0 - dummy sync flag']
  #allocation22 [shape = 's32[]', space=sflag, size = 0x4, offset = 0, fixed_abs, tag = 'sflag constant byte address 0x0 - dummy sync flag']
  #allocation23 [shape = 's32[]', space=sflag, size = 0x4, offset = 0, fixed_abs, tag = 'sflag constant byte address 0x0 - dummy sync flag']
  %s0 = inlined_call_operand.vmem [shape: s32[8], index: 0, kind: input, shape index: {}]
  %s1 = inlined_call_operand.vmem [shape: f32[64,256], index: 1, kind: input, shape index: {}]
  %s2 = inlined_call_operand.hbm [shape: f32[8,256], index: 2, kind: output, shape index: {}]
  %s3 = sld [smem:[#allocation0]]
  $region498: #{device_fn.1} parent=0
    _
  %s5 = ssub.s32 1, %s3
  %s6 = scalar_select 0, %s5, %s3
  %s7 = sshll.u32 %s0, 4
  %s8 = int_to_ptr.vmem [resolvable:$true] %s7
  %10 = dma.vmem_to_smem %s8, 16, [#allocation5], [#allocation4]
  %11 = dma.done [#allocation4], 16
  %12 = sfence
  $region1: #{device_fn.1} parent=0
    #allocation6 [shape = 'u8[8192]{0}', space=vmem, size = 0x2000, scoped, tag = 'output window, operand 0, single buffered']
    #allocation7 [shape = 's32[1]{0}', space=sflag, size = 0x4, scoped, tag = 'scoped memory for device_fn.1']
    %13 = vsyncpa [#allocation7], 0
    %s14 = sand.u32 0, 1
    %p15 = scmp.eq.s32.totalorder 0, 0
    // Predicated region
    $region2: #{device_fn.1} parent=1 // pred_check
      %p16 = pneg %p15
    $region3: #{device_fn.1} parent=1 // pred_check_branch
      %18 = sbr.rel (%p16) target = $region5
    $region4: #{device_fn.1} parent=1 // pred_region
      %s19 = sld [smem:[#allocation5]]
      %s20 = sshrl.u32 %s19, 3
      %s21 = sand.u32 %s19, 7
      %s22 = smul.u32 %s20, 16
      %s23 = sadd.s32 %s21, %s22
      %s24 = scalar_lea.vmem %s1, %s23
      %p26 = scmp.lt.u32.totalorder 1, 8
      %p27 = pneg %p26
      // Predicated region
      $region6: #{device_fn.1} parent=4 // pred_check
        _
      $region7: #{device_fn.1} parent=4 // pred_check_branch
        %29 = sbr.rel (%p26) target = $region9
      $region8: #{device_fn.1} parent=4 // pred_region
        %s47 = sand.u32 1, 7
        %p48 = scmp.eq.s32.totalorder %s47, 0
        %p49 = pneg %p48
        // Predicated region
        $region21: #{device_fn.1} parent=8 // pred_check
          _
        $region22: #{device_fn.1} parent=8 // pred_check_branch
          %51 = sbr.rel (%p48) target = $region24
        $region23: #{device_fn.1} parent=8 // pred_region
          %s52 = sand.u32 1, 7
          %s53 = ssub.s32 1, %s52
          %s54 = scalar_lea.vmem %s24, %s53
          %s55 = ssub.s32 1, %s52
          %s56 = scalar_lea.vmem [#allocation2], %s55
          %s57 = sshll.u32 1, %s52
          %s58 = ssub.s32 %s57, 1
          loop: start=0, step=1, limit=1
          $region25: #{device_fn.1} parent=23 // loop_pre_header
            _
          $region26: #{device_fn.1} parent=23 // loop_header
            %s60 = sphi 0, %s64
            %p61 = scmp.ge.s32.totalorder %s60, 1
            %s65 = sphi %s54, %s54
            %s66 = sphi %s56, %s56
          $region27: #{device_fn.1} parent=23 // loop_header_branch
            %63 = sbr.rel (%p61) target = $region31
          $region28: #{device_fn.1} parent=23 // loop_body
            %v67 = vld [vmem:[%s65] sm:%s58]
            %68 = vst [vmem:[%s66] sm:%s58] %v67
            %v69 = vld [vmem:[%s65 + $0x8] sm:%s58]
            %70 = vst [vmem:[%s66 + $0x8] sm:%s58] %v69
          $region29: #{device_fn.1} parent=23 // loop_footer
            %s64 = sadd.s32 1, %s60
          $region30: #{device_fn.1} parent=23 // loop_footer_branch
            %59 = sbr.rel target = $region26
          $region31: #{device_fn.1} parent=23 // loop_exit
            _
        $region24: #{device_fn.1} parent=8 // pred_fallthru
          _
      $region9: #{device_fn.1} parent=4 // pred_fallthru
        _
      // Predicated region
      $region10: #{device_fn.1} parent=4 // pred_check
        %p30 = pneg %p26
      $region11: #{device_fn.1} parent=4 // pred_check_branch
        %32 = sbr.rel (%p30) target = $region13
      $region12: #{device_fn.1} parent=4 // pred_region
        %s33 = sshll.u32 1, 1
        %s34 = ssub.s32 %s33, 1
        loop: start=0, step=1, limit=1
        $region14: #{device_fn.1} parent=12 // loop_pre_header
          _
        $region15: #{device_fn.1} parent=12 // loop_header
          %s36 = sphi 0, %s40
          %p37 = scmp.ge.s32.totalorder %s36, 1
          %s41 = sphi %s24, %s24
          %s42 = sphi [#allocation2], [#allocation2]
        $region16: #{device_fn.1} parent=12 // loop_header_branch
          %39 = sbr.rel (%p37) target = $region20
        $region17: #{device_fn.1} parent=12 // loop_body
          %v43 = vld [vmem:[%s41] sm:%s34]
          %44 = vst [vmem:[%s42] sm:%s34] %v43
          %v45 = vld [vmem:[%s41 + $0x8] sm:%s34]
          %46 = vst [vmem:[%s42 + $0x8] sm:%s34] %v45
        $region18: #{device_fn.1} parent=12 // loop_footer
          %s40 = sadd.s32 1, %s36
        $region19: #{device_fn.1} parent=12 // loop_footer_branch
          %35 = sbr.rel target = $region15
        $region20: #{device_fn.1} parent=12 // loop_exit
          _
      $region13: #{device_fn.1} parent=4 // pred_fallthru
        _
      // Predicated region
      $region32: #{device_fn.1} parent=4 // pred_check
        _
      $region33: #{device_fn.1} parent=4 // pred_check_branch
        %73 = sbr.rel (0) target = $region35
      $region34: #{device_fn.1} parent=4 // pred_region
        %74 = vsyncadd [#allocation3], 32
      $region35: #{device_fn.1} parent=4 // pred_fallthru
        _
      %s75 = sld [smem:[#allocation5 + $0x1]]
      %s76 = sshrl.u32 %s75, 3
      %s77 = sand.u32 %s75, 7
      %s78 = smul.u32 %s76, 16
      %s79 = sadd.s32 %s77, %s78
      %s80 = scalar_lea.vmem %s1, %s79
      %s81 = scalar_lea.vmem [#allocation2], 1
      %s82 = scalar_lea.sflag [#allocation3], 1
      %p84 = scmp.lt.u32.totalorder 1, 8
      %p85 = pneg %p84
      // Predicated region
      $region36: #{device_fn.1} parent=4 // pred_check
        _
      $region37: #{device_fn.1} parent=4 // pred_check_branch
        %87 = sbr.rel (%p84) target = $region39
      $region38: #{device_fn.1} parent=4 // pred_region
        %s105 = sand.u32 1, 7
        %p106 = scmp.eq.s32.totalorder %s105, 0
        %p107 = pneg %p106
        // Predicated region
        $region51: #{device_fn.1} parent=38 // pred_check
          _
        $region52: #{device_fn.1} parent=38 // pred_check_branch
          %109 = sbr.rel (%p106) target = $region54
        $region53: #{device_fn.1} parent=38 // pred_region
          %s110 = sand.u32 1, 7
          %s111 = ssub.s32 1, %s110
          %s112 = scalar_lea.vmem %s80, %s111
          %s113 = ssub.s32 1, %s110
          %s114 = scalar_lea.vmem %s81, %s113 [#allocation2]
          %s115 = sshll.u32 1, %s110
          %s116 = ssub.s32 %s115, 1
          loop: start=0, step=1, limit=1
          $region55: #{device_fn.1} parent=53 // loop_pre_header
            _
          $region56: #{device_fn.1} parent=53 // loop_header
            %s118 = sphi 0, %s122
            %p119 = scmp.ge.s32.totalorder %s118, 1
            %s123 = sphi %s112, %s112
            %s124 = sphi %s114, %s114
          $region57: #{device_fn.1} parent=53 // loop_header_branch
            %121 = sbr.rel (%p119) target = $region61
          $region58: #{device_fn.1} parent=53 // loop_body
            %v125 = vld [vmem:[%s123] sm:%s116]
            %126 = vst [vmem:[%s124] sm:%s116] %v125
            %v127 = vld [vmem:[%s123 + $0x8] sm:%s116]
            %128 = vst [vmem:[%s124 + $0x8] sm:%s116] %v127
          $region59: #{device_fn.1} parent=53 // loop_footer
            %s122 = sadd.s32 1, %s118
          $region60: #{device_fn.1} parent=53 // loop_footer_branch
            %117 = sbr.rel target = $region56
          $region61: #{device_fn.1} parent=53 // loop_exit
            _
        $region54: #{device_fn.1} parent=38 // pred_fallthru
          _
      $region39: #{device_fn.1} parent=4 // pred_fallthru
        _
      // Predicated region
      $region40: #{device_fn.1} parent=4 // pred_check
        %p88 = pneg %p84
      $region41: #{device_fn.1} parent=4 // pred_check_branch
        %90 = sbr.rel (%p88) target = $region43
      $region42: #{device_fn.1} parent=4 // pred_region
        %s91 = sshll.u32 1, 1
        %s92 = ssub.s32 %s91, 1
        loop: start=0, step=1, limit=1
        $region44: #{device_fn.1} parent=42 // loop_pre_header
          _
        $region45: #{device_fn.1} parent=42 // loop_header
          %s94 = sphi 0, %s98
          %p95 = scmp.ge.s32.totalorder %s94, 1
          %s99 = sphi %s80, %s80
          %s100 = sphi %s81, %s81
        $region46: #{device_fn.1} parent=42 // loop_header_branch
          %97 = sbr.rel (%p95) target = $region50
        $region47: #{device_fn.1} parent=42 // loop_body
          %v101 = vld [vmem:[%s99] sm:%s92]
          %102 = vst [vmem:[%s100] sm:%s92] %v101
          %v103 = vld [vmem:[%s99 + $0x8] sm:%s92]
          %104 = vst [vmem:[%s100 + $0x8] sm:%s92] %v103
        $region48: #{device_fn.1} parent=42 // loop_footer
          %s98 = sadd.s32 1, %s94
        $region49: #{device_fn.1} parent=42 // loop_footer_branch
          %93 = sbr.rel target = $region45
        $region50: #{device_fn.1} parent=42 // loop_exit
          _
      $region43: #{device_fn.1} parent=4 // pred_fallthru
        _
      // Predicated region
      $region62: #{device_fn.1} parent=4 // pred_check
        _
      $region63: #{device_fn.1} parent=4 // pred_check_branch
        %131 = sbr.rel (0) target = $region65
      $region64: #{device_fn.1} parent=4 // pred_region
        %132 = vsyncadd %s82, 32
      $region65: #{device_fn.1} parent=4 // pred_fallthru
        _
      %s133 = sld [smem:[#allocation5 + $0x2]]
      %s134 = sshrl.u32 %s133, 3
      %s135 = sand.u32 %s133, 7
      %s136 = smul.u32 %s134, 16
      %s137 = sadd.s32 %s135, %s136
      %s138 = scalar_lea.vmem %s1, %s137
      %s139 = scalar_lea.vmem [#allocation2], 2
      %s140 = scalar_lea.sflag [#allocation3], 2
      %p142 = scmp.lt.u32.totalorder 1, 8
      %p143 = pneg %p142
      // Predicated region
      $region66: #{device_fn.1} parent=4 // pred_check
        _
      $region67: #{device_fn.1} parent=4 // pred_check_branch
        %145 = sbr.rel (%p142) target = $region69
      $region68: #{device_fn.1} parent=4 // pred_region
        %s163 = sand.u32 1, 7
        %p164 = scmp.eq.s32.totalorder %s163, 0
        %p165 = pneg %p164
        // Predicated region
        $region81: #{device_fn.1} parent=68 // pred_check
          _
        $region82: #{device_fn.1} parent=68 // pred_check_branch
          %167 = sbr.rel (%p164) target = $region84
        $region83: #{device_fn.1} parent=68 // pred_region
          %s168 = sand.u32 1, 7
          %s169 = ssub.s32 1, %s168
          %s170 = scalar_lea.vmem %s138, %s169
          %s171 = ssub.s32 1, %s168
          %s172 = scalar_lea.vmem %s139, %s171 [#allocation2]
          %s173 = sshll.u32 1, %s168
          %s174 = ssub.s32 %s173, 1
          loop: start=0, step=1, limit=1
          $region85: #{device_fn.1} parent=83 // loop_pre_header
            _
          $region86: #{device_fn.1} parent=83 // loop_header
            %s176 = sphi 0, %s180
            %p177 = scmp.ge.s32.totalorder %s176, 1
            %s181 = sphi %s170, %s170
            %s182 = sphi %s172, %s172
          $region87: #{device_fn.1} parent=83 // loop_header_branch
            %179 = sbr.rel (%p177) target = $region91
          $region88: #{device_fn.1} parent=83 // loop_body
            %v183 = vld [vmem:[%s181] sm:%s174]
            %184 = vst [vmem:[%s182] sm:%s174] %v183
            %v185 = vld [vmem:[%s181 + $0x8] sm:%s174]
            %186 = vst [vmem:[%s182 + $0x8] sm:%s174] %v185
          $region89: #{device_fn.1} parent=83 // loop_footer
            %s180 = sadd.s32 1, %s176
          $region90: #{device_fn.1} parent=83 // loop_footer_branch
            %175 = sbr.rel target = $region86
          $region91: #{device_fn.1} parent=83 // loop_exit
            _
        $region84: #{device_fn.1} parent=68 // pred_fallthru
          _
      $region69: #{device_fn.1} parent=4 // pred_fallthru
        _
      // Predicated region
      $region70: #{device_fn.1} parent=4 // pred_check
        %p146 = pneg %p142
      $region71: #{device_fn.1} parent=4 // pred_check_branch
        %148 = sbr.rel (%p146) target = $region73
      $region72: #{device_fn.1} parent=4 // pred_region
        %s149 = sshll.u32 1, 1
        %s150 = ssub.s32 %s149, 1
        loop: start=0, step=1, limit=1
        $region74: #{device_fn.1} parent=72 // loop_pre_header
          _
        $region75: #{device_fn.1} parent=72 // loop_header
          %s152 = sphi 0, %s156
          %p153 = scmp.ge.s32.totalorder %s152, 1
          %s157 = sphi %s138, %s138
          %s158 = sphi %s139, %s139
        $region76: #{device_fn.1} parent=72 // loop_header_branch
          %155 = sbr.rel (%p153) target = $region80
        $region77: #{device_fn.1} parent=72 // loop_body
          %v159 = vld [vmem:[%s157] sm:%s150]
          %160 = vst [vmem:[%s158] sm:%s150] %v159
          %v161 = vld [vmem:[%s157 + $0x8] sm:%s150]
          %162 = vst [vmem:[%s158 + $0x8] sm:%s150] %v161
        $region78: #{device_fn.1} parent=72 // loop_footer
          %s156 = sadd.s32 1, %s152
        $region79: #{device_fn.1} parent=72 // loop_footer_branch
          %151 = sbr.rel target = $region75
        $region80: #{device_fn.1} parent=72 // loop_exit
          _
      $region73: #{device_fn.1} parent=4 // pred_fallthru
        _
      // Predicated region
      $region92: #{device_fn.1} parent=4 // pred_check
        _
      $region93: #{device_fn.1} parent=4 // pred_check_branch
        %189 = sbr.rel (0) target = $region95
      $region94: #{device_fn.1} parent=4 // pred_region
        %190 = vsyncadd %s140, 32
      $region95: #{device_fn.1} parent=4 // pred_fallthru
        _
      %s191 = sld [smem:[#allocation5 + $0x3]]
      %s192 = sshrl.u32 %s191, 3
      %s193 = sand.u32 %s191, 7
      %s194 = smul.u32 %s192, 16
      %s195 = sadd.s32 %s193, %s194
      %s196 = scalar_lea.vmem %s1, %s195
      %s197 = scalar_lea.vmem [#allocation2], 3
      %s198 = scalar_lea.sflag [#allocation3], 3
      %p200 = scmp.lt.u32.totalorder 1, 8
      %p201 = pneg %p200
      // Predicated region
      $region96: #{device_fn.1} parent=4 // pred_check
        _
      $region97: #{device_fn.1} parent=4 // pred_check_branch
        %203 = sbr.rel (%p200) target = $region99
      $region98: #{device_fn.1} parent=4 // pred_region
        %s221 = sand.u32 1, 7
        %p222 = scmp.eq.s32.totalorder %s221, 0
        %p223 = pneg %p222
        // Predicated region
        $region111: #{device_fn.1} parent=98 // pred_check
          _
        $region112: #{device_fn.1} parent=98 // pred_check_branch
          %225 = sbr.rel (%p222) target = $region114
        $region113: #{device_fn.1} parent=98 // pred_region
          %s226 = sand.u32 1, 7
          %s227 = ssub.s32 1, %s226
          %s228 = scalar_lea.vmem %s196, %s227
          %s229 = ssub.s32 1, %s226
          %s230 = scalar_lea.vmem %s197, %s229 [#allocation2]
          %s231 = sshll.u32 1, %s226
          %s232 = ssub.s32 %s231, 1
          loop: start=0, step=1, limit=1
          $region115: #{device_fn.1} parent=113 // loop_pre_header
            _
          $region116: #{device_fn.1} parent=113 // loop_header
            %s234 = sphi 0, %s238
            %p235 = scmp.ge.s32.totalorder %s234, 1
            %s239 = sphi %s228, %s228
            %s240 = sphi %s230, %s230
          $region117: #{device_fn.1} parent=113 // loop_header_branch
            %237 = sbr.rel (%p235) target = $region121
          $region118: #{device_fn.1} parent=113 // loop_body
            %v241 = vld [vmem:[%s239] sm:%s232]
            %242 = vst [vmem:[%s240] sm:%s232] %v241
            %v243 = vld [vmem:[%s239 + $0x8] sm:%s232]
            %244 = vst [vmem:[%s240 + $0x8] sm:%s232] %v243
          $region119: #{device_fn.1} parent=113 // loop_footer
            %s238 = sadd.s32 1, %s234
          $region120: #{device_fn.1} parent=113 // loop_footer_branch
            %233 = sbr.rel target = $region116
          $region121: #{device_fn.1} parent=113 // loop_exit
            _
        $region114: #{device_fn.1} parent=98 // pred_fallthru
          _
      $region99: #{device_fn.1} parent=4 // pred_fallthru
        _
      // Predicated region
      $region100: #{device_fn.1} parent=4 // pred_check
        %p204 = pneg %p200
      $region101: #{device_fn.1} parent=4 // pred_check_branch
        %206 = sbr.rel (%p204) target = $region103
      $region102: #{device_fn.1} parent=4 // pred_region
        %s207 = sshll.u32 1, 1
        %s208 = ssub.s32 %s207, 1
        loop: start=0, step=1, limit=1
        $region104: #{device_fn.1} parent=102 // loop_pre_header
          _
        $region105: #{device_fn.1} parent=102 // loop_header
          %s210 = sphi 0, %s214
          %p211 = scmp.ge.s32.totalorder %s210, 1
          %s215 = sphi %s196, %s196
          %s216 = sphi %s197, %s197
        $region106: #{device_fn.1} parent=102 // loop_header_branch
          %213 = sbr.rel (%p211) target = $region110
        $region107: #{device_fn.1} parent=102 // loop_body
          %v217 = vld [vmem:[%s215] sm:%s208]
          %218 = vst [vmem:[%s216] sm:%s208] %v217
          %v219 = vld [vmem:[%s215 + $0x8] sm:%s208]
          %220 = vst [vmem:[%s216 + $0x8] sm:%s208] %v219
        $region108: #{device_fn.1} parent=102 // loop_footer
          %s214 = sadd.s32 1, %s210
        $region109: #{device_fn.1} parent=102 // loop_footer_branch
          %209 = sbr.rel target = $region105
        $region110: #{device_fn.1} parent=102 // loop_exit
          _
      $region103: #{device_fn.1} parent=4 // pred_fallthru
        _
      // Predicated region
      $region122: #{device_fn.1} parent=4 // pred_check
        _
      $region123: #{device_fn.1} parent=4 // pred_check_branch
        %247 = sbr.rel (0) target = $region125
      $region124: #{device_fn.1} parent=4 // pred_region
        %248 = vsyncadd %s198, 32
      $region125: #{device_fn.1} parent=4 // pred_fallthru
        _
      %s249 = sld [smem:[#allocation5 + $0x4]]
      %s250 = sshrl.u32 %s249, 3
      %s251 = sand.u32 %s249, 7
      %s252 = smul.u32 %s250, 16
      %s253 = sadd.s32 %s251, %s252
      %s254 = scalar_lea.vmem %s1, %s253
      %s255 = scalar_lea.vmem [#allocation2], 4
      %s256 = scalar_lea.sflag [#allocation3], 4
      %p258 = scmp.lt.u32.totalorder 1, 8
      %p259 = pneg %p258
      // Predicated region
      $region126: #{device_fn.1} parent=4 // pred_check
        _
      $region127: #{device_fn.1} parent=4 // pred_check_branch
        %261 = sbr.rel (%p258) target = $region129
      $region128: #{device_fn.1} parent=4 // pred_region
        %s279 = sand.u32 1, 7
        %p280 = scmp.eq.s32.totalorder %s279, 0
        %p281 = pneg %p280
        // Predicated region
        $region141: #{device_fn.1} parent=128 // pred_check
          _
        $region142: #{device_fn.1} parent=128 // pred_check_branch
          %283 = sbr.rel (%p280) target = $region144
        $region143: #{device_fn.1} parent=128 // pred_region
          %s284 = sand.u32 1, 7
          %s285 = ssub.s32 1, %s284
          %s286 = scalar_lea.vmem %s254, %s285
          %s287 = ssub.s32 1, %s284
          %s288 = scalar_lea.vmem %s255, %s287 [#allocation2]
          %s289 = sshll.u32 1, %s284
          %s290 = ssub.s32 %s289, 1
          loop: start=0, step=1, limit=1
          $region145: #{device_fn.1} parent=143 // loop_pre_header
            _
          $region146: #{device_fn.1} parent=143 // loop_header
            %s292 = sphi 0, %s296
            %p293 = scmp.ge.s32.totalorder %s292, 1
            %s297 = sphi %s286, %s286
            %s298 = sphi %s288, %s288
          $region147: #{device_fn.1} parent=143 // loop_header_branch
            %295 = sbr.rel (%p293) target = $region151
          $region148: #{device_fn.1} parent=143 // loop_body
            %v299 = vld [vmem:[%s297] sm:%s290]
            %300 = vst [vmem:[%s298] sm:%s290] %v299
            %v301 = vld [vmem:[%s297 + $0x8] sm:%s290]
            %302 = vst [vmem:[%s298 + $0x8] sm:%s290] %v301
          $region149: #{device_fn.1} parent=143 // loop_footer
            %s296 = sadd.s32 1, %s292
          $region150: #{device_fn.1} parent=143 // loop_footer_branch
            %291 = sbr.rel target = $region146
          $region151: #{device_fn.1} parent=143 // loop_exit
            _
        $region144: #{device_fn.1} parent=128 // pred_fallthru
          _
      $region129: #{device_fn.1} parent=4 // pred_fallthru
        _
      // Predicated region
      $region130: #{device_fn.1} parent=4 // pred_check
        %p262 = pneg %p258
      $region131: #{device_fn.1} parent=4 // pred_check_branch
        %264 = sbr.rel (%p262) target = $region133
      $region132: #{device_fn.1} parent=4 // pred_region
        %s265 = sshll.u32 1, 1
        %s266 = ssub.s32 %s265, 1
        loop: start=0, step=1, limit=1
        $region134: #{device_fn.1} parent=132 // loop_pre_header
          _
        $region135: #{device_fn.1} parent=132 // loop_header
          %s268 = sphi 0, %s272
          %p269 = scmp.ge.s32.totalorder %s268, 1
          %s273 = sphi %s254, %s254
          %s274 = sphi %s255, %s255
        $region136: #{device_fn.1} parent=132 // loop_header_branch
          %271 = sbr.rel (%p269) target = $region140
        $region137: #{device_fn.1} parent=132 // loop_body
          %v275 = vld [vmem:[%s273] sm:%s266]
          %276 = vst [vmem:[%s274] sm:%s266] %v275
          %v277 = vld [vmem:[%s273 + $0x8] sm:%s266]
          %278 = vst [vmem:[%s274 + $0x8] sm:%s266] %v277
        $region138: #{device_fn.1} parent=132 // loop_footer
          %s272 = sadd.s32 1, %s268
        $region139: #{device_fn.1} parent=132 // loop_footer_branch
          %267 = sbr.rel target = $region135
        $region140: #{device_fn.1} parent=132 // loop_exit
          _
      $region133: #{device_fn.1} parent=4 // pred_fallthru
        _
      // Predicated region
      $region152: #{device_fn.1} parent=4 // pred_check
        _
      $region153: #{device_fn.1} parent=4 // pred_check_branch
        %305 = sbr.rel (0) target = $region155
      $region154: #{device_fn.1} parent=4 // pred_region
        %306 = vsyncadd %s256, 32
      $region155: #{device_fn.1} parent=4 // pred_fallthru
        _
      %s307 = sld [smem:[#allocation5 + $0x5]]
      %s308 = sshrl.u32 %s307, 3
      %s309 = sand.u32 %s307, 7
      %s310 = smul.u32 %s308, 16
      %s311 = sadd.s32 %s309, %s310
      %s312 = scalar_lea.vmem %s1, %s311
      %s313 = scalar_lea.vmem [#allocation2], 5
      %s314 = scalar_lea.sflag [#allocation3], 5
      %p316 = scmp.lt.u32.totalorder 1, 8
      %p317 = pneg %p316
      // Predicated region
      $region156: #{device_fn.1} parent=4 // pred_check
        _
      $region157: #{device_fn.1} parent=4 // pred_check_branch
        %319 = sbr.rel (%p316) target = $region159
      $region158: #{device_fn.1} parent=4 // pred_region
        %s337 = sand.u32 1, 7
        %p338 = scmp.eq.s32.totalorder %s337, 0
        %p339 = pneg %p338
        // Predicated region
        $region171: #{device_fn.1} parent=158 // pred_check
          _
        $region172: #{device_fn.1} parent=158 // pred_check_branch
          %341 = sbr.rel (%p338) target = $region174
        $region173: #{device_fn.1} parent=158 // pred_region
          %s342 = sand.u32 1, 7
          %s343 = ssub.s32 1, %s342
          %s344 = scalar_lea.vmem %s312, %s343
          %s345 = ssub.s32 1, %s342
          %s346 = scalar_lea.vmem %s313, %s345 [#allocation2]
          %s347 = sshll.u32 1, %s342
          %s348 = ssub.s32 %s347, 1
          loop: start=0, step=1, limit=1
          $region175: #{device_fn.1} parent=173 // loop_pre_header
            _
          $region176: #{device_fn.1} parent=173 // loop_header
            %s350 = sphi 0, %s354
            %p351 = scmp.ge.s32.totalorder %s350, 1
            %s355 = sphi %s344, %s344
            %s356 = sphi %s346, %s346
          $region177: #{device_fn.1} parent=173 // loop_header_branch
            %353 = sbr.rel (%p351) target = $region181
          $region178: #{device_fn.1} parent=173 // loop_body
            %v357 = vld [vmem:[%s355] sm:%s348]
            %358 = vst [vmem:[%s356] sm:%s348] %v357
            %v359 = vld [vmem:[%s355 + $0x8] sm:%s348]
            %360 = vst [vmem:[%s356 + $0x8] sm:%s348] %v359
          $region179: #{device_fn.1} parent=173 // loop_footer
            %s354 = sadd.s32 1, %s350
          $region180: #{device_fn.1} parent=173 // loop_footer_branch
            %349 = sbr.rel target = $region176
          $region181: #{device_fn.1} parent=173 // loop_exit
            _
        $region174: #{device_fn.1} parent=158 // pred_fallthru
          _
      $region159: #{device_fn.1} parent=4 // pred_fallthru
        _
      // Predicated region
      $region160: #{device_fn.1} parent=4 // pred_check
        %p320 = pneg %p316
      $region161: #{device_fn.1} parent=4 // pred_check_branch
        %322 = sbr.rel (%p320) target = $region163
      $region162: #{device_fn.1} parent=4 // pred_region
        %s323 = sshll.u32 1, 1
        %s324 = ssub.s32 %s323, 1
        loop: start=0, step=1, limit=1
        $region164: #{device_fn.1} parent=162 // loop_pre_header
          _
        $region165: #{device_fn.1} parent=162 // loop_header
          %s326 = sphi 0, %s330
          %p327 = scmp.ge.s32.totalorder %s326, 1
          %s331 = sphi %s312, %s312
          %s332 = sphi %s313, %s313
        $region166: #{device_fn.1} parent=162 // loop_header_branch
          %329 = sbr.rel (%p327) target = $region170
        $region167: #{device_fn.1} parent=162 // loop_body
          %v333 = vld [vmem:[%s331] sm:%s324]
          %334 = vst [vmem:[%s332] sm:%s324] %v333
          %v335 = vld [vmem:[%s331 + $0x8] sm:%s324]
          %336 = vst [vmem:[%s332 + $0x8] sm:%s324] %v335
        $region168: #{device_fn.1} parent=162 // loop_footer
          %s330 = sadd.s32 1, %s326
        $region169: #{device_fn.1} parent=162 // loop_footer_branch
          %325 = sbr.rel target = $region165
        $region170: #{device_fn.1} parent=162 // loop_exit
          _
      $region163: #{device_fn.1} parent=4 // pred_fallthru
        _
      // Predicated region
      $region182: #{device_fn.1} parent=4 // pred_check
        _
      $region183: #{device_fn.1} parent=4 // pred_check_branch
        %363 = sbr.rel (0) target = $region185
      $region184: #{device_fn.1} parent=4 // pred_region
        %364 = vsyncadd %s314, 32
      $region185: #{device_fn.1} parent=4 // pred_fallthru
        _
      %s365 = sld [smem:[#allocation5 + $0x6]]
      %s366 = sshrl.u32 %s365, 3
      %s367 = sand.u32 %s365, 7
      %s368 = smul.u32 %s366, 16
      %s369 = sadd.s32 %s367, %s368
      %s370 = scalar_lea.vmem %s1, %s369
      %s371 = scalar_lea.vmem [#allocation2], 6
      %s372 = scalar_lea.sflag [#allocation3], 6
      %p374 = scmp.lt.u32.totalorder 1, 8
      %p375 = pneg %p374
      // Predicated region
      $region186: #{device_fn.1} parent=4 // pred_check
        _
      $region187: #{device_fn.1} parent=4 // pred_check_branch
        %377 = sbr.rel (%p374) target = $region189
      $region188: #{device_fn.1} parent=4 // pred_region
        %s395 = sand.u32 1, 7
        %p396 = scmp.eq.s32.totalorder %s395, 0
        %p397 = pneg %p396
        // Predicated region
        $region201: #{device_fn.1} parent=188 // pred_check
          _
        $region202: #{device_fn.1} parent=188 // pred_check_branch
          %399 = sbr.rel (%p396) target = $region204
        $region203: #{device_fn.1} parent=188 // pred_region
          %s400 = sand.u32 1, 7
          %s401 = ssub.s32 1, %s400
          %s402 = scalar_lea.vmem %s370, %s401
          %s403 = ssub.s32 1, %s400
          %s404 = scalar_lea.vmem %s371, %s403 [#allocation2]
          %s405 = sshll.u32 1, %s400
          %s406 = ssub.s32 %s405, 1
          loop: start=0, step=1, limit=1
          $region205: #{device_fn.1} parent=203 // loop_pre_header
            _
          $region206: #{device_fn.1} parent=203 // loop_header
            %s408 = sphi 0, %s412
            %p409 = scmp.ge.s32.totalorder %s408, 1
            %s413 = sphi %s402, %s402
            %s414 = sphi %s404, %s404
          $region207: #{device_fn.1} parent=203 // loop_header_branch
            %411 = sbr.rel (%p409) target = $region211
          $region208: #{device_fn.1} parent=203 // loop_body
            %v415 = vld [vmem:[%s413] sm:%s406]
            %416 = vst [vmem:[%s414] sm:%s406] %v415
            %v417 = vld [vmem:[%s413 + $0x8] sm:%s406]
            %418 = vst [vmem:[%s414 + $0x8] sm:%s406] %v417
          $region209: #{device_fn.1} parent=203 // loop_footer
            %s412 = sadd.s32 1, %s408
          $region210: #{device_fn.1} parent=203 // loop_footer_branch
            %407 = sbr.rel target = $region206
          $region211: #{device_fn.1} parent=203 // loop_exit
            _
        $region204: #{device_fn.1} parent=188 // pred_fallthru
          _
      $region189: #{device_fn.1} parent=4 // pred_fallthru
        _
      // Predicated region
      $region190: #{device_fn.1} parent=4 // pred_check
        %p378 = pneg %p374
      $region191: #{device_fn.1} parent=4 // pred_check_branch
        %380 = sbr.rel (%p378) target = $region193
      $region192: #{device_fn.1} parent=4 // pred_region
        %s381 = sshll.u32 1, 1
        %s382 = ssub.s32 %s381, 1
        loop: start=0, step=1, limit=1
        $region194: #{device_fn.1} parent=192 // loop_pre_header
          _
        $region195: #{device_fn.1} parent=192 // loop_header
          %s384 = sphi 0, %s388
          %p385 = scmp.ge.s32.totalorder %s384, 1
          %s389 = sphi %s370, %s370
          %s390 = sphi %s371, %s371
        $region196: #{device_fn.1} parent=192 // loop_header_branch
          %387 = sbr.rel (%p385) target = $region200
        $region197: #{device_fn.1} parent=192 // loop_body
          %v391 = vld [vmem:[%s389] sm:%s382]
          %392 = vst [vmem:[%s390] sm:%s382] %v391
          %v393 = vld [vmem:[%s389 + $0x8] sm:%s382]
          %394 = vst [vmem:[%s390 + $0x8] sm:%s382] %v393
        $region198: #{device_fn.1} parent=192 // loop_footer
          %s388 = sadd.s32 1, %s384
        $region199: #{device_fn.1} parent=192 // loop_footer_branch
          %383 = sbr.rel target = $region195
        $region200: #{device_fn.1} parent=192 // loop_exit
          _
      $region193: #{device_fn.1} parent=4 // pred_fallthru
        _
      // Predicated region
      $region212: #{device_fn.1} parent=4 // pred_check
        _
      $region213: #{device_fn.1} parent=4 // pred_check_branch
        %421 = sbr.rel (0) target = $region215
      $region214: #{device_fn.1} parent=4 // pred_region
        %422 = vsyncadd %s372, 32
      $region215: #{device_fn.1} parent=4 // pred_fallthru
        _
      %s423 = sld [smem:[#allocation5 + $0x7]]
      %s424 = sshrl.u32 %s423, 3
      %s425 = sand.u32 %s423, 7
      %s426 = smul.u32 %s424, 16
      %s427 = sadd.s32 %s425, %s426
      %s428 = scalar_lea.vmem %s1, %s427
      %s429 = scalar_lea.vmem [#allocation2], 7
      %s430 = scalar_lea.sflag [#allocation3], 7
      %p432 = scmp.lt.u32.totalorder 1, 8
      %p433 = pneg %p432
      // Predicated region
      $region216: #{device_fn.1} parent=4 // pred_check
        _
      $region217: #{device_fn.1} parent=4 // pred_check_branch
        %435 = sbr.rel (%p432) target = $region219
      $region218: #{device_fn.1} parent=4 // pred_region
        %s453 = sand.u32 1, 7
        %p454 = scmp.eq.s32.totalorder %s453, 0
        %p455 = pneg %p454
        // Predicated region
        $region231: #{device_fn.1} parent=218 // pred_check
          _
        $region232: #{device_fn.1} parent=218 // pred_check_branch
          %457 = sbr.rel (%p454) target = $region234
        $region233: #{device_fn.1} parent=218 // pred_region
          %s458 = sand.u32 1, 7
          %s459 = ssub.s32 1, %s458
          %s460 = scalar_lea.vmem %s428, %s459
          %s461 = ssub.s32 1, %s458
          %s462 = scalar_lea.vmem %s429, %s461 [#allocation2]
          %s463 = sshll.u32 1, %s458
          %s464 = ssub.s32 %s463, 1
          loop: start=0, step=1, limit=1
          $region235: #{device_fn.1} parent=233 // loop_pre_header
            _
          $region236: #{device_fn.1} parent=233 // loop_header
            %s466 = sphi 0, %s470
            %p467 = scmp.ge.s32.totalorder %s466, 1
            %s471 = sphi %s460, %s460
            %s472 = sphi %s462, %s462
          $region237: #{device_fn.1} parent=233 // loop_header_branch
            %469 = sbr.rel (%p467) target = $region241
          $region238: #{device_fn.1} parent=233 // loop_body
            %v473 = vld [vmem:[%s471] sm:%s464]
            %474 = vst [vmem:[%s472] sm:%s464] %v473
            %v475 = vld [vmem:[%s471 + $0x8] sm:%s464]
            %476 = vst [vmem:[%s472 + $0x8] sm:%s464] %v475
          $region239: #{device_fn.1} parent=233 // loop_footer
            %s470 = sadd.s32 1, %s466
          $region240: #{device_fn.1} parent=233 // loop_footer_branch
            %465 = sbr.rel target = $region236
          $region241: #{device_fn.1} parent=233 // loop_exit
            _
        $region234: #{device_fn.1} parent=218 // pred_fallthru
          _
      $region219: #{device_fn.1} parent=4 // pred_fallthru
        _
      // Predicated region
      $region220: #{device_fn.1} parent=4 // pred_check
        %p436 = pneg %p432
      $region221: #{device_fn.1} parent=4 // pred_check_branch
        %438 = sbr.rel (%p436) target = $region223
      $region222: #{device_fn.1} parent=4 // pred_region
        %s439 = sshll.u32 1, 1
        %s440 = ssub.s32 %s439, 1
        loop: start=0, step=1, limit=1
        $region224: #{device_fn.1} parent=222 // loop_pre_header
          _
        $region225: #{device_fn.1} parent=222 // loop_header
          %s442 = sphi 0, %s446
          %p443 = scmp.ge.s32.totalorder %s442, 1
          %s447 = sphi %s428, %s428
          %s448 = sphi %s429, %s429
        $region226: #{device_fn.1} parent=222 // loop_header_branch
          %445 = sbr.rel (%p443) target = $region230
        $region227: #{device_fn.1} parent=222 // loop_body
          %v449 = vld [vmem:[%s447] sm:%s440]
          %450 = vst [vmem:[%s448] sm:%s440] %v449
          %v451 = vld [vmem:[%s447 + $0x8] sm:%s440]
          %452 = vst [vmem:[%s448 + $0x8] sm:%s440] %v451
        $region228: #{device_fn.1} parent=222 // loop_footer
          %s446 = sadd.s32 1, %s442
        $region229: #{device_fn.1} parent=222 // loop_footer_branch
          %441 = sbr.rel target = $region225
        $region230: #{device_fn.1} parent=222 // loop_exit
          _
      $region223: #{device_fn.1} parent=4 // pred_fallthru
        _
      // Predicated region
      $region242: #{device_fn.1} parent=4 // pred_check
        _
      $region243: #{device_fn.1} parent=4 // pred_check_branch
        %479 = sbr.rel (0) target = $region245
      $region244: #{device_fn.1} parent=4 // pred_region
        %480 = vsyncadd %s430, 32
      $region245: #{device_fn.1} parent=4 // pred_fallthru
        _
    $region5: #{device_fn.1} parent=1 // pred_fallthru
      _
    %s481 = sadd.s32 0, 1
    %p482 = scmp.lt.s32.totalorder %s481, 1
    // Predicated region
    $region246: #{device_fn.1} parent=1 // pred_check
      %p483 = pneg %p482
    $region247: #{device_fn.1} parent=1 // pred_check_branch
      %485 = sbr.rel (%p483) target = $region249
    $region248: #{device_fn.1} parent=1 // pred_region
      %s486 = ssub.s32 1, %s14
      %s487 = smul.u32 %s481, 8
      %s488 = sld [smem:[#allocation5 + %s487]]
      %s489 = sshrl.u32 %s488, 3
      %s490 = sand.u32 %s488, 7
      %s491 = smul.u32 %s489, 16
      %s492 = sadd.s32 %s490, %s491
      %s493 = scalar_lea.vmem %s1, %s492
      %s494 = smul.u32 %s486, 16
      %s495 = scalar_lea.vmem [#allocation2], %s494
      %s496 = smul.u32 %s486, 8
      %s497 = scalar_lea.sflag [#allocation3], %s496
      %p499 = scmp.lt.u32.totalorder 1, 8
      %p500 = pneg %p499
      // Predicated region
      $region250: #{device_fn.1} parent=248 // pred_check
        _
      $region251: #{device_fn.1} parent=248 // pred_check_branch
        %502 = sbr.rel (%p499) target = $region253
      $region252: #{device_fn.1} parent=248 // pred_region
        %s520 = sand.u32 1, 7
        %p521 = scmp.eq.s32.totalorder %s520, 0
        %p522 = pneg %p521
        // Predicated region
        $region265: #{device_fn.1} parent=252 // pred_check
          _
        $region266: #{device_fn.1} parent=252 // pred_check_branch
          %524 = sbr.rel (%p521) target = $region268
        $region267: #{device_fn.1} parent=252 // pred_region
          %s525 = sand.u32 1, 7
          %s526 = ssub.s32 1, %s525
          %s527 = scalar_lea.vmem %s493, %s526
          %s528 = ssub.s32 1, %s525
          %s529 = scalar_lea.vmem %s495, %s528 [#allocation2]
          %s530 = sshll.u32 1, %s525
          %s531 = ssub.s32 %s530, 1
          loop: start=0, step=1, limit=1
          $region269: #{device_fn.1} parent=267 // loop_pre_header
            _
          $region270: #{device_fn.1} parent=267 // loop_header
            %s533 = sphi 0, %s537
            %p534 = scmp.ge.s32.totalorder %s533, 1
            %s538 = sphi %s527, %s527
            %s539 = sphi %s529, %s529
          $region271: #{device_fn.1} parent=267 // loop_header_branch
            %536 = sbr.rel (%p534) target = $region275
          $region272: #{device_fn.1} parent=267 // loop_body
            %v540 = vld [vmem:[%s538] sm:%s531]
            %541 = vst [vmem:[%s539] sm:%s531] %v540
            %v542 = vld [vmem:[%s538 + $0x8] sm:%s531]
            %543 = vst [vmem:[%s539 + $0x8] sm:%s531] %v542
          $region273: #{device_fn.1} parent=267 // loop_footer
            %s537 = sadd.s32 1, %s533
          $region274: #{device_fn.1} parent=267 // loop_footer_branch
            %532 = sbr.rel target = $region270
          $region275: #{device_fn.1} parent=267 // loop_exit
            _
        $region268: #{device_fn.1} parent=252 // pred_fallthru
          _
      $region253: #{device_fn.1} parent=248 // pred_fallthru
        _
      // Predicated region
      $region254: #{device_fn.1} parent=248 // pred_check
        %p503 = pneg %p499
      $region255: #{device_fn.1} parent=248 // pred_check_branch
        %505 = sbr.rel (%p503) target = $region257
      $region256: #{device_fn.1} parent=248 // pred_region
        %s506 = sshll.u32 1, 1
        %s507 = ssub.s32 %s506, 1
        loop: start=0, step=1, limit=1
        $region258: #{device_fn.1} parent=256 // loop_pre_header
          _
        $region259: #{device_fn.1} parent=256 // loop_header
          %s509 = sphi 0, %s513
          %p510 = scmp.ge.s32.totalorder %s509, 1
          %s514 = sphi %s493, %s493
          %s515 = sphi %s495, %s495
        $region260: #{device_fn.1} parent=256 // loop_header_branch
          %512 = sbr.rel (%p510) target = $region264
        $region261: #{device_fn.1} parent=256 // loop_body
          %v516 = vld [vmem:[%s514] sm:%s507]
          %517 = vst [vmem:[%s515] sm:%s507] %v516
          %v518 = vld [vmem:[%s514 + $0x8] sm:%s507]
          %519 = vst [vmem:[%s515 + $0x8] sm:%s507] %v518
        $region262: #{device_fn.1} parent=256 // loop_footer
          %s513 = sadd.s32 1, %s509
        $region263: #{device_fn.1} parent=256 // loop_footer_branch
          %508 = sbr.rel target = $region259
        $region264: #{device_fn.1} parent=256 // loop_exit
          _
      $region257: #{device_fn.1} parent=248 // pred_fallthru
        _
      // Predicated region
      $region276: #{device_fn.1} parent=248 // pred_check
        _
      $region277: #{device_fn.1} parent=248 // pred_check_branch
        %546 = sbr.rel (0) target = $region279
      $region278: #{device_fn.1} parent=248 // pred_region
        %547 = vsyncadd %s497, 32
      $region279: #{device_fn.1} parent=248 // pred_fallthru
        _
      %s548 = sadd.s32 %s487, 1
      %s549 = sld [smem:[#allocation5 + %s548]]
      %s550 = sshrl.u32 %s549, 3
      %s551 = sand.u32 %s549, 7
      %s552 = smul.u32 %s550, 16
      %s553 = sadd.s32 %s551, %s552
      %s554 = scalar_lea.vmem %s1, %s553
      %s555 = sadd.s32 1, %s494
      %s556 = scalar_lea.vmem [#allocation2], %s555
      %s557 = sadd.s32 1, %s496
      %s558 = scalar_lea.sflag [#allocation3], %s557
      %p560 = scmp.lt.u32.totalorder 1, 8
      %p561 = pneg %p560
      // Predicated region
      $region280: #{device_fn.1} parent=248 // pred_check
        _
      $region281: #{device_fn.1} parent=248 // pred_check_branch
        %563 = sbr.rel (%p560) target = $region283
      $region282: #{device_fn.1} parent=248 // pred_region
        %s581 = sand.u32 1, 7
        %p582 = scmp.eq.s32.totalorder %s581, 0
        %p583 = pneg %p582
        // Predicated region
        $region295: #{device_fn.1} parent=282 // pred_check
          _
        $region296: #{device_fn.1} parent=282 // pred_check_branch
          %585 = sbr.rel (%p582) target = $region298
        $region297: #{device_fn.1} parent=282 // pred_region
          %s586 = sand.u32 1, 7
          %s587 = ssub.s32 1, %s586
          %s588 = scalar_lea.vmem %s554, %s587
          %s589 = ssub.s32 1, %s586
          %s590 = scalar_lea.vmem %s556, %s589 [#allocation2]
          %s591 = sshll.u32 1, %s586
          %s592 = ssub.s32 %s591, 1
          loop: start=0, step=1, limit=1
          $region299: #{device_fn.1} parent=297 // loop_pre_header
            _
          $region300: #{device_fn.1} parent=297 // loop_header
            %s594 = sphi 0, %s598
            %p595 = scmp.ge.s32.totalorder %s594, 1
            %s599 = sphi %s588, %s588
            %s600 = sphi %s590, %s590
          $region301: #{device_fn.1} parent=297 // loop_header_branch
            %597 = sbr.rel (%p595) target = $region305
          $region302: #{device_fn.1} parent=297 // loop_body
            %v601 = vld [vmem:[%s599] sm:%s592]
            %602 = vst [vmem:[%s600] sm:%s592] %v601
            %v603 = vld [vmem:[%s599 + $0x8] sm:%s592]
            %604 = vst [vmem:[%s600 + $0x8] sm:%s592] %v603
          $region303: #{device_fn.1} parent=297 // loop_footer
            %s598 = sadd.s32 1, %s594
          $region304: #{device_fn.1} parent=297 // loop_footer_branch
            %593 = sbr.rel target = $region300
          $region305: #{device_fn.1} parent=297 // loop_exit
            _
        $region298: #{device_fn.1} parent=282 // pred_fallthru
          _
      $region283: #{device_fn.1} parent=248 // pred_fallthru
        _
      // Predicated region
      $region284: #{device_fn.1} parent=248 // pred_check
        %p564 = pneg %p560
      $region285: #{device_fn.1} parent=248 // pred_check_branch
        %566 = sbr.rel (%p564) target = $region287
      $region286: #{device_fn.1} parent=248 // pred_region
        %s567 = sshll.u32 1, 1
        %s568 = ssub.s32 %s567, 1
        loop: start=0, step=1, limit=1
        $region288: #{device_fn.1} parent=286 // loop_pre_header
          _
        $region289: #{device_fn.1} parent=286 // loop_header
          %s570 = sphi 0, %s574
          %p571 = scmp.ge.s32.totalorder %s570, 1
          %s575 = sphi %s554, %s554
          %s576 = sphi %s556, %s556
        $region290: #{device_fn.1} parent=286 // loop_header_branch
          %573 = sbr.rel (%p571) target = $region294
        $region291: #{device_fn.1} parent=286 // loop_body
          %v577 = vld [vmem:[%s575] sm:%s568]
          %578 = vst [vmem:[%s576] sm:%s568] %v577
          %v579 = vld [vmem:[%s575 + $0x8] sm:%s568]
          %580 = vst [vmem:[%s576 + $0x8] sm:%s568] %v579
        $region292: #{device_fn.1} parent=286 // loop_footer
          %s574 = sadd.s32 1, %s570
        $region293: #{device_fn.1} parent=286 // loop_footer_branch
          %569 = sbr.rel target = $region289
        $region294: #{device_fn.1} parent=286 // loop_exit
          _
      $region287: #{device_fn.1} parent=248 // pred_fallthru
        _
      // Predicated region
      $region306: #{device_fn.1} parent=248 // pred_check
        _
      $region307: #{device_fn.1} parent=248 // pred_check_branch
        %607 = sbr.rel (0) target = $region309
      $region308: #{device_fn.1} parent=248 // pred_region
        %608 = vsyncadd %s558, 32
      $region309: #{device_fn.1} parent=248 // pred_fallthru
        _
      %s609 = sadd.s32 %s487, 2
      %s610 = sld [smem:[#allocation5 + %s609]]
      %s611 = sshrl.u32 %s610, 3
      %s612 = sand.u32 %s610, 7
      %s613 = smul.u32 %s611, 16
      %s614 = sadd.s32 %s612, %s613
      %s615 = scalar_lea.vmem %s1, %s614
      %s616 = sadd.s32 2, %s494
      %s617 = scalar_lea.vmem [#allocation2], %s616
      %s618 = sadd.s32 2, %s496
      %s619 = scalar_lea.sflag [#allocation3], %s618
      %p621 = scmp.lt.u32.totalorder 1, 8
      %p622 = pneg %p621
      // Predicated region
      $region310: #{device_fn.1} parent=248 // pred_check
        _
      $region311: #{device_fn.1} parent=248 // pred_check_branch
        %624 = sbr.rel (%p621) target = $region313
      $region312: #{device_fn.1} parent=248 // pred_region
        %s642 = sand.u32 1, 7
        %p643 = scmp.eq.s32.totalorder %s642, 0
        %p644 = pneg %p643
        // Predicated region
        $region325: #{device_fn.1} parent=312 // pred_check
          _
        $region326: #{device_fn.1} parent=312 // pred_check_branch
          %646 = sbr.rel (%p643) target = $region328
        $region327: #{device_fn.1} parent=312 // pred_region
          %s647 = sand.u32 1, 7
          %s648 = ssub.s32 1, %s647
          %s649 = scalar_lea.vmem %s615, %s648
          %s650 = ssub.s32 1, %s647
          %s651 = scalar_lea.vmem %s617, %s650 [#allocation2]
          %s652 = sshll.u32 1, %s647
          %s653 = ssub.s32 %s652, 1
          loop: start=0, step=1, limit=1
          $region329: #{device_fn.1} parent=327 // loop_pre_header
            _
          $region330: #{device_fn.1} parent=327 // loop_header
            %s655 = sphi 0, %s659
            %p656 = scmp.ge.s32.totalorder %s655, 1
            %s660 = sphi %s649, %s649
            %s661 = sphi %s651, %s651
          $region331: #{device_fn.1} parent=327 // loop_header_branch
            %658 = sbr.rel (%p656) target = $region335
          $region332: #{device_fn.1} parent=327 // loop_body
            %v662 = vld [vmem:[%s660] sm:%s653]
            %663 = vst [vmem:[%s661] sm:%s653] %v662
            %v664 = vld [vmem:[%s660 + $0x8] sm:%s653]
            %665 = vst [vmem:[%s661 + $0x8] sm:%s653] %v664
          $region333: #{device_fn.1} parent=327 // loop_footer
            %s659 = sadd.s32 1, %s655
          $region334: #{device_fn.1} parent=327 // loop_footer_branch
            %654 = sbr.rel target = $region330
          $region335: #{device_fn.1} parent=327 // loop_exit
            _
        $region328: #{device_fn.1} parent=312 // pred_fallthru
          _
      $region313: #{device_fn.1} parent=248 // pred_fallthru
        _
      // Predicated region
      $region314: #{device_fn.1} parent=248 // pred_check
        %p625 = pneg %p621
      $region315: #{device_fn.1} parent=248 // pred_check_branch
        %627 = sbr.rel (%p625) target = $region317
      $region316: #{device_fn.1} parent=248 // pred_region
        %s628 = sshll.u32 1, 1
        %s629 = ssub.s32 %s628, 1
        loop: start=0, step=1, limit=1
        $region318: #{device_fn.1} parent=316 // loop_pre_header
          _
        $region319: #{device_fn.1} parent=316 // loop_header
          %s631 = sphi 0, %s635
          %p632 = scmp.ge.s32.totalorder %s631, 1
          %s636 = sphi %s615, %s615
          %s637 = sphi %s617, %s617
        $region320: #{device_fn.1} parent=316 // loop_header_branch
          %634 = sbr.rel (%p632) target = $region324
        $region321: #{device_fn.1} parent=316 // loop_body
          %v638 = vld [vmem:[%s636] sm:%s629]
          %639 = vst [vmem:[%s637] sm:%s629] %v638
          %v640 = vld [vmem:[%s636 + $0x8] sm:%s629]
          %641 = vst [vmem:[%s637 + $0x8] sm:%s629] %v640
        $region322: #{device_fn.1} parent=316 // loop_footer
          %s635 = sadd.s32 1, %s631
        $region323: #{device_fn.1} parent=316 // loop_footer_branch
          %630 = sbr.rel target = $region319
        $region324: #{device_fn.1} parent=316 // loop_exit
          _
      $region317: #{device_fn.1} parent=248 // pred_fallthru
        _
      // Predicated region
      $region336: #{device_fn.1} parent=248 // pred_check
        _
      $region337: #{device_fn.1} parent=248 // pred_check_branch
        %668 = sbr.rel (0) target = $region339
      $region338: #{device_fn.1} parent=248 // pred_region
        %669 = vsyncadd %s619, 32
      $region339: #{device_fn.1} parent=248 // pred_fallthru
        _
      %s670 = sadd.s32 %s487, 3
      %s671 = sld [smem:[#allocation5 + %s670]]
      %s672 = sshrl.u32 %s671, 3
      %s673 = sand.u32 %s671, 7
      %s674 = smul.u32 %s672, 16
      %s675 = sadd.s32 %s673, %s674
      %s676 = scalar_lea.vmem %s1, %s675
      %s677 = sadd.s32 3, %s494
      %s678 = scalar_lea.vmem [#allocation2], %s677
      %s679 = sadd.s32 3, %s496
      %s680 = scalar_lea.sflag [#allocation3], %s679
      %p682 = scmp.lt.u32.totalorder 1, 8
      %p683 = pneg %p682
      // Predicated region
      $region340: #{device_fn.1} parent=248 // pred_check
        _
      $region341: #{device_fn.1} parent=248 // pred_check_branch
        %685 = sbr.rel (%p682) target = $region343
      $region342: #{device_fn.1} parent=248 // pred_region
        %s703 = sand.u32 1, 7
        %p704 = scmp.eq.s32.totalorder %s703, 0
        %p705 = pneg %p704
        // Predicated region
        $region355: #{device_fn.1} parent=342 // pred_check
          _
        $region356: #{device_fn.1} parent=342 // pred_check_branch
          %707 = sbr.rel (%p704) target = $region358
        $region357: #{device_fn.1} parent=342 // pred_region
          %s708 = sand.u32 1, 7
          %s709 = ssub.s32 1, %s708
          %s710 = scalar_lea.vmem %s676, %s709
          %s711 = ssub.s32 1, %s708
          %s712 = scalar_lea.vmem %s678, %s711 [#allocation2]
          %s713 = sshll.u32 1, %s708
          %s714 = ssub.s32 %s713, 1
          loop: start=0, step=1, limit=1
          $region359: #{device_fn.1} parent=357 // loop_pre_header
            _
          $region360: #{device_fn.1} parent=357 // loop_header
            %s716 = sphi 0, %s720
            %p717 = scmp.ge.s32.totalorder %s716, 1
            %s721 = sphi %s710, %s710
            %s722 = sphi %s712, %s712
          $region361: #{device_fn.1} parent=357 // loop_header_branch
            %719 = sbr.rel (%p717) target = $region365
          $region362: #{device_fn.1} parent=357 // loop_body
            %v723 = vld [vmem:[%s721] sm:%s714]
            %724 = vst [vmem:[%s722] sm:%s714] %v723
            %v725 = vld [vmem:[%s721 + $0x8] sm:%s714]
            %726 = vst [vmem:[%s722 + $0x8] sm:%s714] %v725
          $region363: #{device_fn.1} parent=357 // loop_footer
            %s720 = sadd.s32 1, %s716
          $region364: #{device_fn.1} parent=357 // loop_footer_branch
            %715 = sbr.rel target = $region360
          $region365: #{device_fn.1} parent=357 // loop_exit
            _
        $region358: #{device_fn.1} parent=342 // pred_fallthru
          _
      $region343: #{device_fn.1} parent=248 // pred_fallthru
        _
      // Predicated region
      $region344: #{device_fn.1} parent=248 // pred_check
        %p686 = pneg %p682
      $region345: #{device_fn.1} parent=248 // pred_check_branch
        %688 = sbr.rel (%p686) target = $region347
      $region346: #{device_fn.1} parent=248 // pred_region
        %s689 = sshll.u32 1, 1
        %s690 = ssub.s32 %s689, 1
        loop: start=0, step=1, limit=1
        $region348: #{device_fn.1} parent=346 // loop_pre_header
          _
        $region349: #{device_fn.1} parent=346 // loop_header
          %s692 = sphi 0, %s696
          %p693 = scmp.ge.s32.totalorder %s692, 1
          %s697 = sphi %s676, %s676
          %s698 = sphi %s678, %s678
        $region350: #{device_fn.1} parent=346 // loop_header_branch
          %695 = sbr.rel (%p693) target = $region354
        $region351: #{device_fn.1} parent=346 // loop_body
          %v699 = vld [vmem:[%s697] sm:%s690]
          %700 = vst [vmem:[%s698] sm:%s690] %v699
          %v701 = vld [vmem:[%s697 + $0x8] sm:%s690]
          %702 = vst [vmem:[%s698 + $0x8] sm:%s690] %v701
        $region352: #{device_fn.1} parent=346 // loop_footer
          %s696 = sadd.s32 1, %s692
        $region353: #{device_fn.1} parent=346 // loop_footer_branch
          %691 = sbr.rel target = $region349
        $region354: #{device_fn.1} parent=346 // loop_exit
          _
      $region347: #{device_fn.1} parent=248 // pred_fallthru
        _
      // Predicated region
      $region366: #{device_fn.1} parent=248 // pred_check
        _
      $region367: #{device_fn.1} parent=248 // pred_check_branch
        %729 = sbr.rel (0) target = $region369
      $region368: #{device_fn.1} parent=248 // pred_region
        %730 = vsyncadd %s680, 32
      $region369: #{device_fn.1} parent=248 // pred_fallthru
        _
      %s731 = sadd.s32 %s487, 4
      %s732 = sld [smem:[#allocation5 + %s731]]
      %s733 = sshrl.u32 %s732, 3
      %s734 = sand.u32 %s732, 7
      %s735 = smul.u32 %s733, 16
      %s736 = sadd.s32 %s734, %s735
      %s737 = scalar_lea.vmem %s1, %s736
      %s738 = sadd.s32 4, %s494
      %s739 = scalar_lea.vmem [#allocation2], %s738
      %s740 = sadd.s32 4, %s496
      %s741 = scalar_lea.sflag [#allocation3], %s740
      %p743 = scmp.lt.u32.totalorder 1, 8
      %p744 = pneg %p743
      // Predicated region
      $region370: #{device_fn.1} parent=248 // pred_check
        _
      $region371: #{device_fn.1} parent=248 // pred_check_branch
        %746 = sbr.rel (%p743) target = $region373
      $region372: #{device_fn.1} parent=248 // pred_region
        %s764 = sand.u32 1, 7
        %p765 = scmp.eq.s32.totalorder %s764, 0
        %p766 = pneg %p765
        // Predicated region
        $region385: #{device_fn.1} parent=372 // pred_check
          _
        $region386: #{device_fn.1} parent=372 // pred_check_branch
          %768 = sbr.rel (%p765) target = $region388
        $region387: #{device_fn.1} parent=372 // pred_region
          %s769 = sand.u32 1, 7
          %s770 = ssub.s32 1, %s769
          %s771 = scalar_lea.vmem %s737, %s770
          %s772 = ssub.s32 1, %s769
          %s773 = scalar_lea.vmem %s739, %s772 [#allocation2]
          %s774 = sshll.u32 1, %s769
          %s775 = ssub.s32 %s774, 1
          loop: start=0, step=1, limit=1
          $region389: #{device_fn.1} parent=387 // loop_pre_header
            _
          $region390: #{device_fn.1} parent=387 // loop_header
            %s777 = sphi 0, %s781
            %p778 = scmp.ge.s32.totalorder %s777, 1
            %s782 = sphi %s771, %s771
            %s783 = sphi %s773, %s773
          $region391: #{device_fn.1} parent=387 // loop_header_branch
            %780 = sbr.rel (%p778) target = $region395
          $region392: #{device_fn.1} parent=387 // loop_body
            %v784 = vld [vmem:[%s782] sm:%s775]
            %785 = vst [vmem:[%s783] sm:%s775] %v784
            %v786 = vld [vmem:[%s782 + $0x8] sm:%s775]
            %787 = vst [vmem:[%s783 + $0x8] sm:%s775] %v786
          $region393: #{device_fn.1} parent=387 // loop_footer
            %s781 = sadd.s32 1, %s777
          $region394: #{device_fn.1} parent=387 // loop_footer_branch
            %776 = sbr.rel target = $region390
          $region395: #{device_fn.1} parent=387 // loop_exit
            _
        $region388: #{device_fn.1} parent=372 // pred_fallthru
          _
      $region373: #{device_fn.1} parent=248 // pred_fallthru
        _
      // Predicated region
      $region374: #{device_fn.1} parent=248 // pred_check
        %p747 = pneg %p743
      $region375: #{device_fn.1} parent=248 // pred_check_branch
        %749 = sbr.rel (%p747) target = $region377
      $region376: #{device_fn.1} parent=248 // pred_region
        %s750 = sshll.u32 1, 1
        %s751 = ssub.s32 %s750, 1
        loop: start=0, step=1, limit=1
        $region378: #{device_fn.1} parent=376 // loop_pre_header
          _
        $region379: #{device_fn.1} parent=376 // loop_header
          %s753 = sphi 0, %s757
          %p754 = scmp.ge.s32.totalorder %s753, 1
          %s758 = sphi %s737, %s737
          %s759 = sphi %s739, %s739
        $region380: #{device_fn.1} parent=376 // loop_header_branch
          %756 = sbr.rel (%p754) target = $region384
        $region381: #{device_fn.1} parent=376 // loop_body
          %v760 = vld [vmem:[%s758] sm:%s751]
          %761 = vst [vmem:[%s759] sm:%s751] %v760
          %v762 = vld [vmem:[%s758 + $0x8] sm:%s751]
          %763 = vst [vmem:[%s759 + $0x8] sm:%s751] %v762
        $region382: #{device_fn.1} parent=376 // loop_footer
          %s757 = sadd.s32 1, %s753
        $region383: #{device_fn.1} parent=376 // loop_footer_branch
          %752 = sbr.rel target = $region379
        $region384: #{device_fn.1} parent=376 // loop_exit
          _
      $region377: #{device_fn.1} parent=248 // pred_fallthru
        _
      // Predicated region
      $region396: #{device_fn.1} parent=248 // pred_check
        _
      $region397: #{device_fn.1} parent=248 // pred_check_branch
        %790 = sbr.rel (0) target = $region399
      $region398: #{device_fn.1} parent=248 // pred_region
        %791 = vsyncadd %s741, 32
      $region399: #{device_fn.1} parent=248 // pred_fallthru
        _
      %s792 = sadd.s32 %s487, 5
      %s793 = sld [smem:[#allocation5 + %s792]]
      %s794 = sshrl.u32 %s793, 3
      %s795 = sand.u32 %s793, 7
      %s796 = smul.u32 %s794, 16
      %s797 = sadd.s32 %s795, %s796
      %s798 = scalar_lea.vmem %s1, %s797
      %s799 = sadd.s32 5, %s494
      %s800 = scalar_lea.vmem [#allocation2], %s799
      %s801 = sadd.s32 5, %s496
      %s802 = scalar_lea.sflag [#allocation3], %s801
      %p804 = scmp.lt.u32.totalorder 1, 8
      %p805 = pneg %p804
      // Predicated region
      $region400: #{device_fn.1} parent=248 // pred_check
        _
      $region401: #{device_fn.1} parent=248 // pred_check_branch
        %807 = sbr.rel (%p804) target = $region403
      $region402: #{device_fn.1} parent=248 // pred_region
        %s825 = sand.u32 1, 7
        %p826 = scmp.eq.s32.totalorder %s825, 0
        %p827 = pneg %p826
        // Predicated region
        $region415: #{device_fn.1} parent=402 // pred_check
          _
        $region416: #{device_fn.1} parent=402 // pred_check_branch
          %829 = sbr.rel (%p826) target = $region418
        $region417: #{device_fn.1} parent=402 // pred_region
          %s830 = sand.u32 1, 7
          %s831 = ssub.s32 1, %s830
          %s832 = scalar_lea.vmem %s798, %s831
          %s833 = ssub.s32 1, %s830
          %s834 = scalar_lea.vmem %s800, %s833 [#allocation2]
          %s835 = sshll.u32 1, %s830
          %s836 = ssub.s32 %s835, 1
          loop: start=0, step=1, limit=1
          $region419: #{device_fn.1} parent=417 // loop_pre_header
            _
          $region420: #{device_fn.1} parent=417 // loop_header
            %s838 = sphi 0, %s842
            %p839 = scmp.ge.s32.totalorder %s838, 1
            %s843 = sphi %s832, %s832
            %s844 = sphi %s834, %s834
          $region421: #{device_fn.1} parent=417 // loop_header_branch
            %841 = sbr.rel (%p839) target = $region425
          $region422: #{device_fn.1} parent=417 // loop_body
            %v845 = vld [vmem:[%s843] sm:%s836]
            %846 = vst [vmem:[%s844] sm:%s836] %v845
            %v847 = vld [vmem:[%s843 + $0x8] sm:%s836]
            %848 = vst [vmem:[%s844 + $0x8] sm:%s836] %v847
          $region423: #{device_fn.1} parent=417 // loop_footer
            %s842 = sadd.s32 1, %s838
          $region424: #{device_fn.1} parent=417 // loop_footer_branch
            %837 = sbr.rel target = $region420
          $region425: #{device_fn.1} parent=417 // loop_exit
            _
        $region418: #{device_fn.1} parent=402 // pred_fallthru
          _
      $region403: #{device_fn.1} parent=248 // pred_fallthru
        _
      // Predicated region
      $region404: #{device_fn.1} parent=248 // pred_check
        %p808 = pneg %p804
      $region405: #{device_fn.1} parent=248 // pred_check_branch
        %810 = sbr.rel (%p808) target = $region407
      $region406: #{device_fn.1} parent=248 // pred_region
        %s811 = sshll.u32 1, 1
        %s812 = ssub.s32 %s811, 1
        loop: start=0, step=1, limit=1
        $region408: #{device_fn.1} parent=406 // loop_pre_header
          _
        $region409: #{device_fn.1} parent=406 // loop_header
          %s814 = sphi 0, %s818
          %p815 = scmp.ge.s32.totalorder %s814, 1
          %s819 = sphi %s798, %s798
          %s820 = sphi %s800, %s800
        $region410: #{device_fn.1} parent=406 // loop_header_branch
          %817 = sbr.rel (%p815) target = $region414
        $region411: #{device_fn.1} parent=406 // loop_body
          %v821 = vld [vmem:[%s819] sm:%s812]
          %822 = vst [vmem:[%s820] sm:%s812] %v821
          %v823 = vld [vmem:[%s819 + $0x8] sm:%s812]
          %824 = vst [vmem:[%s820 + $0x8] sm:%s812] %v823
        $region412: #{device_fn.1} parent=406 // loop_footer
          %s818 = sadd.s32 1, %s814
        $region413: #{device_fn.1} parent=406 // loop_footer_branch
          %813 = sbr.rel target = $region409
        $region414: #{device_fn.1} parent=406 // loop_exit
          _
      $region407: #{device_fn.1} parent=248 // pred_fallthru
        _
      // Predicated region
      $region426: #{device_fn.1} parent=248 // pred_check
        _
      $region427: #{device_fn.1} parent=248 // pred_check_branch
        %851 = sbr.rel (0) target = $region429
      $region428: #{device_fn.1} parent=248 // pred_region
        %852 = vsyncadd %s802, 32
      $region429: #{device_fn.1} parent=248 // pred_fallthru
        _
      %s853 = sadd.s32 %s487, 6
      %s854 = sld [smem:[#allocation5 + %s853]]
      %s855 = sshrl.u32 %s854, 3
      %s856 = sand.u32 %s854, 7
      %s857 = smul.u32 %s855, 16
      %s858 = sadd.s32 %s856, %s857
      %s859 = scalar_lea.vmem %s1, %s858
      %s860 = sadd.s32 6, %s494
      %s861 = scalar_lea.vmem [#allocation2], %s860
      %s862 = sadd.s32 6, %s496
      %s863 = scalar_lea.sflag [#allocation3], %s862
      %p865 = scmp.lt.u32.totalorder 1, 8
      %p866 = pneg %p865
      // Predicated region
      $region430: #{device_fn.1} parent=248 // pred_check
        _
      $region431: #{device_fn.1} parent=248 // pred_check_branch
        %868 = sbr.rel (%p865) target = $region433
      $region432: #{device_fn.1} parent=248 // pred_region
        %s886 = sand.u32 1, 7
        %p887 = scmp.eq.s32.totalorder %s886, 0
        %p888 = pneg %p887
        // Predicated region
        $region445: #{device_fn.1} parent=432 // pred_check
          _
        $region446: #{device_fn.1} parent=432 // pred_check_branch
          %890 = sbr.rel (%p887) target = $region448
        $region447: #{device_fn.1} parent=432 // pred_region
          %s891 = sand.u32 1, 7
          %s892 = ssub.s32 1, %s891
          %s893 = scalar_lea.vmem %s859, %s892
          %s894 = ssub.s32 1, %s891
          %s895 = scalar_lea.vmem %s861, %s894 [#allocation2]
          %s896 = sshll.u32 1, %s891
          %s897 = ssub.s32 %s896, 1
          loop: start=0, step=1, limit=1
          $region449: #{device_fn.1} parent=447 // loop_pre_header
            _
          $region450: #{device_fn.1} parent=447 // loop_header
            %s899 = sphi 0, %s903
            %p900 = scmp.ge.s32.totalorder %s899, 1
            %s904 = sphi %s893, %s893
            %s905 = sphi %s895, %s895
          $region451: #{device_fn.1} parent=447 // loop_header_branch
            %902 = sbr.rel (%p900) target = $region455
          $region452: #{device_fn.1} parent=447 // loop_body
            %v906 = vld [vmem:[%s904] sm:%s897]
            %907 = vst [vmem:[%s905] sm:%s897] %v906
            %v908 = vld [vmem:[%s904 + $0x8] sm:%s897]
            %909 = vst [vmem:[%s905 + $0x8] sm:%s897] %v908
          $region453: #{device_fn.1} parent=447 // loop_footer
            %s903 = sadd.s32 1, %s899
          $region454: #{device_fn.1} parent=447 // loop_footer_branch
            %898 = sbr.rel target = $region450
          $region455: #{device_fn.1} parent=447 // loop_exit
            _
        $region448: #{device_fn.1} parent=432 // pred_fallthru
          _
      $region433: #{device_fn.1} parent=248 // pred_fallthru
        _
      // Predicated region
      $region434: #{device_fn.1} parent=248 // pred_check
        %p869 = pneg %p865
      $region435: #{device_fn.1} parent=248 // pred_check_branch
        %871 = sbr.rel (%p869) target = $region437
      $region436: #{device_fn.1} parent=248 // pred_region
        %s872 = sshll.u32 1, 1
        %s873 = ssub.s32 %s872, 1
        loop: start=0, step=1, limit=1
        $region438: #{device_fn.1} parent=436 // loop_pre_header
          _
        $region439: #{device_fn.1} parent=436 // loop_header
          %s875 = sphi 0, %s879
          %p876 = scmp.ge.s32.totalorder %s875, 1
          %s880 = sphi %s859, %s859
          %s881 = sphi %s861, %s861
        $region440: #{device_fn.1} parent=436 // loop_header_branch
          %878 = sbr.rel (%p876) target = $region444
        $region441: #{device_fn.1} parent=436 // loop_body
          %v882 = vld [vmem:[%s880] sm:%s873]
          %883 = vst [vmem:[%s881] sm:%s873] %v882
          %v884 = vld [vmem:[%s880 + $0x8] sm:%s873]
          %885 = vst [vmem:[%s881 + $0x8] sm:%s873] %v884
        $region442: #{device_fn.1} parent=436 // loop_footer
          %s879 = sadd.s32 1, %s875
        $region443: #{device_fn.1} parent=436 // loop_footer_branch
          %874 = sbr.rel target = $region439
        $region444: #{device_fn.1} parent=436 // loop_exit
          _
      $region437: #{device_fn.1} parent=248 // pred_fallthru
        _
      // Predicated region
      $region456: #{device_fn.1} parent=248 // pred_check
        _
      $region457: #{device_fn.1} parent=248 // pred_check_branch
        %912 = sbr.rel (0) target = $region459
      $region458: #{device_fn.1} parent=248 // pred_region
        %913 = vsyncadd %s863, 32
      $region459: #{device_fn.1} parent=248 // pred_fallthru
        _
      %s914 = sadd.s32 %s487, 7
      %s915 = sld [smem:[#allocation5 + %s914]]
      %s916 = sshrl.u32 %s915, 3
      %s917 = sand.u32 %s915, 7
      %s918 = smul.u32 %s916, 16
      %s919 = sadd.s32 %s917, %s918
      %s920 = scalar_lea.vmem %s1, %s919
      %s921 = sadd.s32 7, %s494
      %s922 = scalar_lea.vmem [#allocation2], %s921
      %s923 = sadd.s32 7, %s496
      %s924 = scalar_lea.sflag [#allocation3], %s923
      %p926 = scmp.lt.u32.totalorder 1, 8
      %p927 = pneg %p926
      // Predicated region
      $region460: #{device_fn.1} parent=248 // pred_check
        _
      $region461: #{device_fn.1} parent=248 // pred_check_branch
        %929 = sbr.rel (%p926) target = $region463
      $region462: #{device_fn.1} parent=248 // pred_region
        %s947 = sand.u32 1, 7
        %p948 = scmp.eq.s32.totalorder %s947, 0
        %p949 = pneg %p948
        // Predicated region
        $region475: #{device_fn.1} parent=462 // pred_check
          _
        $region476: #{device_fn.1} parent=462 // pred_check_branch
          %951 = sbr.rel (%p948) target = $region478
        $region477: #{device_fn.1} parent=462 // pred_region
          %s952 = sand.u32 1, 7
          %s953 = ssub.s32 1, %s952
          %s954 = scalar_lea.vmem %s920, %s953
          %s955 = ssub.s32 1, %s952
          %s956 = scalar_lea.vmem %s922, %s955 [#allocation2]
          %s957 = sshll.u32 1, %s952
          %s958 = ssub.s32 %s957, 1
          loop: start=0, step=1, limit=1
          $region479: #{device_fn.1} parent=477 // loop_pre_header
            _
          $region480: #{device_fn.1} parent=477 // loop_header
            %s960 = sphi 0, %s964
            %p961 = scmp.ge.s32.totalorder %s960, 1
            %s965 = sphi %s954, %s954
            %s966 = sphi %s956, %s956
          $region481: #{device_fn.1} parent=477 // loop_header_branch
            %963 = sbr.rel (%p961) target = $region485
          $region482: #{device_fn.1} parent=477 // loop_body
            %v967 = vld [vmem:[%s965] sm:%s958]
            %968 = vst [vmem:[%s966] sm:%s958] %v967
            %v969 = vld [vmem:[%s965 + $0x8] sm:%s958]
            %970 = vst [vmem:[%s966 + $0x8] sm:%s958] %v969
          $region483: #{device_fn.1} parent=477 // loop_footer
            %s964 = sadd.s32 1, %s960
          $region484: #{device_fn.1} parent=477 // loop_footer_branch
            %959 = sbr.rel target = $region480
          $region485: #{device_fn.1} parent=477 // loop_exit
            _
        $region478: #{device_fn.1} parent=462 // pred_fallthru
          _
      $region463: #{device_fn.1} parent=248 // pred_fallthru
        _
      // Predicated region
      $region464: #{device_fn.1} parent=248 // pred_check
        %p930 = pneg %p926
      $region465: #{device_fn.1} parent=248 // pred_check_branch
        %932 = sbr.rel (%p930) target = $region467
      $region466: #{device_fn.1} parent=248 // pred_region
        %s933 = sshll.u32 1, 1
        %s934 = ssub.s32 %s933, 1
        loop: start=0, step=1, limit=1
        $region468: #{device_fn.1} parent=466 // loop_pre_header
          _
        $region469: #{device_fn.1} parent=466 // loop_header
          %s936 = sphi 0, %s940
          %p937 = scmp.ge.s32.totalorder %s936, 1
          %s941 = sphi %s920, %s920
          %s942 = sphi %s922, %s922
        $region470: #{device_fn.1} parent=466 // loop_header_branch
          %939 = sbr.rel (%p937) target = $region474
        $region471: #{device_fn.1} parent=466 // loop_body
          %v943 = vld [vmem:[%s941] sm:%s934]
          %944 = vst [vmem:[%s942] sm:%s934] %v943
          %v945 = vld [vmem:[%s941 + $0x8] sm:%s934]
          %946 = vst [vmem:[%s942 + $0x8] sm:%s934] %v945
        $region472: #{device_fn.1} parent=466 // loop_footer
          %s940 = sadd.s32 1, %s936
        $region473: #{device_fn.1} parent=466 // loop_footer_branch
          %935 = sbr.rel target = $region469
        $region474: #{device_fn.1} parent=466 // loop_exit
          _
      $region467: #{device_fn.1} parent=248 // pred_fallthru
        _
      // Predicated region
      $region486: #{device_fn.1} parent=248 // pred_check
        _
      $region487: #{device_fn.1} parent=248 // pred_check_branch
        %973 = sbr.rel (0) target = $region489
      $region488: #{device_fn.1} parent=248 // pred_region
        %974 = vsyncadd %s924, 32
      $region489: #{device_fn.1} parent=248 // pred_fallthru
        _
    $region249: #{device_fn.1} parent=1 // pred_fallthru
      _
    %s975 = smul.u32 %s14, 8
    %s976 = scalar_lea.sflag [#allocation3], %s975
    %s977 = smul.u32 1, 2
    %s978 = sshll.u32 %s977, 4
    %979 = dma.done %s976, %s978
    %s980 = sadd.s32 1, %s975
    %s981 = scalar_lea.sflag [#allocation3], %s980
    %s982 = sshll.u32 %s977, 4
    %983 = dma.done %s981, %s982
    %s984 = sadd.s32 2, %s975
    %s985 = scalar_lea.sflag [#allocation3], %s984
    %s986 = sshll.u32 %s977, 4
    %987 = dma.done %s985, %s986
    %s988 = sadd.s32 3, %s975
    %s989 = scalar_lea.sflag [#allocation3], %s988
    %s990 = sshll.u32 %s977, 4
    %991 = dma.done %s989, %s990
    %s992 = sadd.s32 4, %s975
    %s993 = scalar_lea.sflag [#allocation3], %s992
    %s994 = sshll.u32 %s977, 4
    %995 = dma.done %s993, %s994
    %s996 = sadd.s32 5, %s975
    %s997 = scalar_lea.sflag [#allocation3], %s996
    %s998 = sshll.u32 %s977, 4
    %999 = dma.done %s997, %s998
    %s1000 = sadd.s32 6, %s975
    %s1001 = scalar_lea.sflag [#allocation3], %s1000
    %s1002 = sshll.u32 %s977, 4
    %1003 = dma.done %s1001, %s1002
    %s1004 = sadd.s32 7, %s975
    %s1005 = scalar_lea.sflag [#allocation3], %s1004
    %s1006 = sshll.u32 %s977, 4
    %1007 = dma.done %s1005, %s1006
    %s1008 = smul.u32 %s14, 2
    %s1009 = smul.addr %s1008, 8
    %s1010 = scalar_lea.vmem [#allocation2], %s1009
    %v1011 = vld [vmem:[%s1010] sm:$0xff]
    %v1012 = vld [vmem:[%s1010 + $0x8] sm:$0xff]
    %1013 = vst [vmem:[#allocation6] sm:$0xff] %v1011
    %1014 = vst [vmem:[#allocation6 + $0x8] sm:$0xff] %v1012
    // Predicated region
    $region490: #{device_fn.1} parent=1 // pred_check
      _
    $region491: #{device_fn.1} parent=1 // pred_check_branch
      %1016 = sbr.rel (0) target = $region493
    $region492: #{device_fn.1} parent=1 // pred_region
      %s1018 = ssub.s32 256, 256
      %1019 = vsyncadd [#allocation7], %s1018
      %s1021 = sshll.u32 [#allocation6], 4
      %s1022 = int_to_ptr.vmem [resolvable:$true] %s1021
      %1024 = dma.vmem_to_hbm [thread:$0]  %s1022, 256, %s2, [#allocation7]
    $region493: #{device_fn.1} parent=1 // pred_fallthru
      _
    // Predicated region
    $region494: #{device_fn.1} parent=1 // pred_check
      _
    $region495: #{device_fn.1} parent=1 // pred_check_branch
      %1026 = sbr.rel (0) target = $region497
    $region496: #{device_fn.1} parent=1 // pred_region
      %1027 = dma.done [#allocation7], 256
    $region497: #{device_fn.1} parent=1 // pred_fallthru
      _
    %1028 = vsyncpa [#allocation7], 1
  %1029 = vsyncmov [#allocation3]
  %s1030 = vpop.sfrf %1029
  %p1031 = scmp.eq.s32.totalorder %s1030, 0
  %p1032 = pneg %p1031
  %1034 = shalt.err (%p1032)
  %s1035 = scalar_lea.sflag [#allocation3], 1
  %1036 = vsyncmov %s1035
  %s1037 = vpop.sfrf %1036
  %p1038 = scmp.eq.s32.totalorder %s1037, 0
  %p1039 = pneg %p1038
  %1041 = shalt.err (%p1039)
  %s1042 = scalar_lea.sflag [#allocation3], 2
  %1043 = vsyncmov %s1042
  %s1044 = vpop.sfrf %1043
  %p1045 = scmp.eq.s32.totalorder %s1044, 0
  %p1046 = pneg %p1045
  %1048 = shalt.err (%p1046)
  %s1049 = scalar_lea.sflag [#allocation3], 3
  %1050 = vsyncmov %s1049
  %s1051 = vpop.sfrf %1050
  %p1052 = scmp.eq.s32.totalorder %s1051, 0
  %p1053 = pneg %p1052
  %1055 = shalt.err (%p1053)
  %s1056 = scalar_lea.sflag [#allocation3], 4
  %1057 = vsyncmov %s1056
  %s1058 = vpop.sfrf %1057
  %p1059 = scmp.eq.s32.totalorder %s1058, 0
  %p1060 = pneg %p1059
  %1062 = shalt.err (%p1060)
  %s1063 = scalar_lea.sflag [#allocation3], 5
  %1064 = vsyncmov %s1063
  %s1065 = vpop.sfrf %1064
  %p1066 = scmp.eq.s32.totalorder %s1065, 0
  %p1067 = pneg %p1066
  %1069 = shalt.err (%p1067)
  %s1070 = scalar_lea.sflag [#allocation3], 6
  %1071 = vsyncmov %s1070
  %s1072 = vpop.sfrf %1071
  %p1073 = scmp.eq.s32.totalorder %s1072, 0
  %p1074 = pneg %p1073
  %1076 = shalt.err (%p1074)
  %s1077 = scalar_lea.sflag [#allocation3], 7
  %1078 = vsyncmov %s1077
  %s1079 = vpop.sfrf %1078
  %p1080 = scmp.eq.s32.totalorder %s1079, 0
  %p1081 = pneg %p1080
  %1083 = shalt.err (%p1081)
  %s1084 = scalar_lea.sflag [#allocation3], 8
  %1085 = vsyncmov %s1084
  %s1086 = vpop.sfrf %1085
  %p1087 = scmp.eq.s32.totalorder %s1086, 0
  %p1088 = pneg %p1087
  %1090 = shalt.err (%p1088)
  %s1091 = scalar_lea.sflag [#allocation3], 9
  %1092 = vsyncmov %s1091
  %s1093 = vpop.sfrf %1092
  %p1094 = scmp.eq.s32.totalorder %s1093, 0
  %p1095 = pneg %p1094
  %1097 = shalt.err (%p1095)
  %s1098 = scalar_lea.sflag [#allocation3], 10
  %1099 = vsyncmov %s1098
  %s1100 = vpop.sfrf %1099
  %p1101 = scmp.eq.s32.totalorder %s1100, 0
  %p1102 = pneg %p1101
  %1104 = shalt.err (%p1102)
  %s1105 = scalar_lea.sflag [#allocation3], 11
  %1106 = vsyncmov %s1105
  %s1107 = vpop.sfrf %1106
  %p1108 = scmp.eq.s32.totalorder %s1107, 0
  %p1109 = pneg %p1108
  %1111 = shalt.err (%p1109)
  %s1112 = scalar_lea.sflag [#allocation3], 12
  %1113 = vsyncmov %s1112
  %s1114 = vpop.sfrf %1113
  %p1115 = scmp.eq.s32.totalorder %s1114, 0
  %p1116 = pneg %p1115
  %1118 = shalt.err (%p1116)
  %s1119 = scalar_lea.sflag [#allocation3], 13
  %1120 = vsyncmov %s1119
  %s1121 = vpop.sfrf %1120
  %p1122 = scmp.eq.s32.totalorder %s1121, 0
  %p1123 = pneg %p1122
  %1125 = shalt.err (%p1123)
  %s1126 = scalar_lea.sflag [#allocation3], 14
  %1127 = vsyncmov %s1126
  %s1128 = vpop.sfrf %1127
  %p1129 = scmp.eq.s32.totalorder %s1128, 0
  %p1130 = pneg %p1129
  %1132 = shalt.err (%p1130)
  %s1133 = scalar_lea.sflag [#allocation3], 15
  %1134 = vsyncmov %s1133
  %s1135 = vpop.sfrf %1134
  %p1136 = scmp.eq.s32.totalorder %s1135, 0
  %p1137 = pneg %p1136
  %1139 = shalt.err (%p1137)

</llo_original>
